<compile_context>
chip_gen: v7x
topology: tpu7x:2x2x1
jax: 0.10.0
libtpu: 0.0.40
codegen_flags: <defaults>
</compile_context>

<pallas_src>
import functools

import jax
import jax.numpy as jnp
from jax import lax
from jax.experimental import pallas as pl
from jax.experimental.pallas import tpu as pltpu

NEG_SLOPE = 0.01          # torch.nn.LeakyReLU default
LANES = 128               # vreg lane width
N_H1, N_H2 = 20, 3        # hidden sizes

ROW_CHUNK = 16            # sublanes per register-resident chunk (~12 live vregs)
UNROLL = 2                # fori_loop unroll factor
BM_ALIGN = ROW_CHUNK * UNROLL   # block row-count granularity (32)

# Packed-parameter layout (flat f32 array, 107 scalars).
W1_OFF = 0                       # w1[j]          j in [0, 20)
B1_OFF = W1_OFF + N_H1           # b1[j]
W2_OFF = B1_OFF + N_H1           # w2[j, k] at W2_OFF + j*3 + k
B2_OFF = W2_OFF + N_H1 * N_H2    # b2[k]
W3_OFF = B2_OFF + N_H2           # w3[k]
B3_OFF = W3_OFF + N_H2           # b3
N_PARAMS = B3_OFF + 1            # 107


def _leaky(x):
    # Exact LeakyReLU for 0 < slope < 1: mul + max (2 VALU ops vs cmp+mul+select).
    return jnp.maximum(x, NEG_SLOPE * x)


def _round_up(a, m):
    return -(-a // m) * m


def mlp_kernel(w_ref, t_ref, o_ref):
    """w_ref: SMEM (107,) packed weights/biases.  t_ref/o_ref: (bm, 128) f32 VMEM tiles."""
    # Hoist all 107 SMEM scalar reads out of the chunk loop (one-time cost per grid
    # step; the per-chunk math then lowers to vector-scalar VPU ops).
    w1 = [w_ref[W1_OFF + j] for j in range(N_H1)]
    b1 = [w_ref[B1_OFF + j] for j in range(N_H1)]
    w2 = [[w_ref[W2_OFF + j * N_H2 + k] for k in range(N_H2)] for j in range(N_H1)]
    b2 = [w_ref[B2_OFF + k] for k in range(N_H2)]
    w3 = [w_ref[W3_OFF + k] for k in range(N_H2)]
    b3 = w_ref[B3_OFF]

    n_chunks = t_ref.shape[0] // ROW_CHUNK   # static; bm is a multiple of ROW_CHUNK*UNROLL

    def chunk(c, carry):
        r = pl.multiple_of(c * ROW_CHUNK, ROW_CHUNK)
        x = t_ref[pl.ds(r, ROW_CHUNK), :]                 # (ROW_CHUNK, 128)

        # Layers 1+2 fused: h2[k] = b2[k] + sum_j leaky(x*w1[j] + b1[j]) * w2[j][k]
        h2 = [None] * N_H2
        for j in range(N_H1):                             # fully unrolled at trace time
            h1 = _leaky(x * w1[j] + b1[j])
            for k in range(N_H2):
                contrib = h1 * w2[j][k]
                h2[k] = contrib + b2[k] if j == 0 else h2[k] + contrib

        # Layer 3: y = b3 + sum_k leaky(h2[k]) * w3[k]
        y = None
        for k in range(N_H2):
            term = _leaky(h2[k]) * w3[k]
            y = term + b3 if k == 0 else y + term

        o_ref[pl.ds(r, ROW_CHUNK), :] = y.astype(o_ref.dtype)
        return carry

    lax.fori_loop(0, n_chunks, chunk, None, unroll=UNROLL)


def pack_params(p):
    """Flatten all weights/biases into one (107,) f32 array (single SMEM operand)."""
    packed = jnp.concatenate([
        p["w1"].reshape(-1),   # (1,20)  -> 20
        p["b1"].reshape(-1),   # (1,20)  -> 20
        p["w2"].reshape(-1),   # (20,3)  -> 60, row-major (j,k)
        p["b2"].reshape(-1),   # (1,3)   -> 3
        p["w3"].reshape(-1),   # (3,1)   -> 3
        p["b3"].reshape(-1),   # (1,1)   -> 1
    ]).astype(jnp.float32)
    assert packed.shape == (N_PARAMS,)
    return packed


@functools.partial(jax.jit, static_argnames=("bm",))
def network_model_forward(t, params, *, bm=2048):
    """t: (N, 1) float32 (any N).  Returns (N, 1) float32."""
    t = jnp.asarray(t, jnp.float32)
    orig_shape = t.shape
    n = t.size

    rows = -(-n // LANES)                               # ceil(N / 128) lane-dense rows
    bm = max(BM_ALIGN, _round_up(bm, BM_ALIGN))
    # Balanced block-size selection (all static Python ints):
    #  * >= 2 grid steps whenever there is enough work (feeds both v7x TensorCores),
    #  * padding waste bounded by ~BM_ALIGN rows per step instead of up to a full tile.
    max_steps = max(1, -(-rows // BM_ALIGN))
    steps = min(max_steps, max(2, -(-rows // bm)))
    bm_eff = _round_up(-(-rows // steps), BM_ALIGN)
    grid = -(-rows // bm_eff)
    rows_final = grid * bm_eff                          # every block full: no partial blocks

    flat = t.reshape(-1)
    pad = rows_final * LANES - n
    if pad:
        flat = jnp.pad(flat, (0, pad))                  # padded tail is sliced off below
    x2d = flat.reshape(rows_final, LANES)               # lane-dense batch layout

    w_packed = pack_params(params)

    out2d = pl.pallas_call(
        mlp_kernel,
        out_shape=jax.ShapeDtypeStruct((rows_final, LANES), jnp.float32),
        grid_spec=pltpu.PrefetchScalarGridSpec(
            num_scalar_prefetch=0,
            grid=(grid,),
            in_specs=[
                # One consolidated scalar-parameter operand, kept in SMEM (no padded
                # VMEM tiles / per-step DMAs for the seven tiny weight arrays).
                pl.BlockSpec(memory_space=pltpu.MemorySpace.SMEM),
                # Lane-dense batch tile: (bm_eff, 128) per grid step.
                pl.BlockSpec((bm_eff, LANES), lambda i: (i, 0)),
            ],
            out_specs=pl.BlockSpec((bm_eff, LANES), lambda i: (i, 0)),
        ),
        compiler_params=pltpu.CompilerParams(
            dimension_semantics=("parallel",),          # shard grid steps across TCs (v7x)
        ),
    )(w_packed, x2d)

    return out2d.reshape(-1)[:n].reshape(orig_shape)


def init_params(key):
    """Deterministic init matching torch.nn.Linear's U(-1/sqrt(fan_in), 1/sqrt(fan_in)).
    Weights stored as (in_features, out_features), biases as (1, out_features)."""
    ks = jax.random.split(key, 6)

    def lin(kw, kb, fan_in, fan_out):
        bound = 1.0 / jnp.sqrt(fan_in)
        w = jax.random.uniform(kw, (fan_in, fan_out), jnp.float32, -bound, bound)
        b = jax.random.uniform(kb, (1, fan_out), jnp.float32, -bound, bound)
        return w, b

    w1, b1 = lin(ks[0], ks[1], 1, 20)
    w2, b2 = lin(ks[2], ks[3], 20, 3)
    w3, b3 = lin(ks[4], ks[5], 3, 1)
    return {"w1": w1, "b1": b1, "w2": w2, "b2": b2, "w3": w3, "b3": b3}


def reference_forward(t, p):
    h1 = _leaky(t @ p["w1"] + p["b1"])
    h2 = _leaky(h1 @ p["w2"] + p["b2"])
    return h2 @ p["w3"] + p["b3"]


if __name__ == "__main__":
    key = jax.random.PRNGKey(0)
    k_param, k_in = jax.random.split(key)
    params = init_params(k_param)

    # Small case matching the module's (N, 1) input contract.
    t_small = jax.random.normal(k_in, (16, 1), dtype=jnp.float32)
    out_small = jax.block_until_ready(network_model_forward(t_small, params))
    ref_small = reference_forward(t_small, params)
    assert out_small.shape == t_small.shape
    assert jnp.allclose(out_small, ref_small, atol=1e-5, rtol=1e-5), "small-batch mismatch"

    # Larger, non-tile-multiple case: exercises minimal padding + a 2-step parallel grid.
    t_big = jax.random.normal(jax.random.PRNGKey(1), (70_000, 1), dtype=jnp.float32)
    out_big = jax.block_until_ready(network_model_forward(t_big, params))
    ref_big = reference_forward(t_big, params)
    assert out_big.shape == t_big.shape
    assert jnp.allclose(out_big, ref_big, atol=1e-5, rtol=1e-5), "large-batch mismatch"

    print("KERNEL_OK")
</pallas_src>

<mosaic_0001>
module attributes {stable_mosaic.version = 11 : i64} {
  func.func @mlp_kernel(%arg0: i32, %arg1: memref<107xf32, #tpu.memory_space<smem>>, %arg2: memref<32x128xf32, #tpu.memory_space<vmem>>, %arg3: memref<32x128xf32, #tpu.memory_space<vmem>>) attributes {dimension_semantics = [#tpu.dimension_semantics<parallel>], iteration_bounds = array<i64: 1>, scalar_prefetch = 0 : i64, scratch_operands = 0 : i64, tpu.core_type = #tpu.core_type<tc>, window_params = [{transform_indices = @transform_0, window_bounds = array<i64: 107>}, {transform_indices = @transform_1, window_bounds = array<i64: 32, 128>}, {transform_indices = @transform_2, window_bounds = array<i64: 32, 128>}]} {
    %c0 = arith.constant 0 : index
    %0 = memref.load %arg1[%c0] : memref<107xf32, #tpu.memory_space<smem>>
    %c1 = arith.constant 1 : index
    %1 = memref.load %arg1[%c1] : memref<107xf32, #tpu.memory_space<smem>>
    %c2 = arith.constant 2 : index
    %2 = memref.load %arg1[%c2] : memref<107xf32, #tpu.memory_space<smem>>
    %c3 = arith.constant 3 : index
    %3 = memref.load %arg1[%c3] : memref<107xf32, #tpu.memory_space<smem>>
    %c4 = arith.constant 4 : index
    %4 = memref.load %arg1[%c4] : memref<107xf32, #tpu.memory_space<smem>>
    %c5 = arith.constant 5 : index
    %5 = memref.load %arg1[%c5] : memref<107xf32, #tpu.memory_space<smem>>
    %c6 = arith.constant 6 : index
    %6 = memref.load %arg1[%c6] : memref<107xf32, #tpu.memory_space<smem>>
    %c7 = arith.constant 7 : index
    %7 = memref.load %arg1[%c7] : memref<107xf32, #tpu.memory_space<smem>>
    %c8 = arith.constant 8 : index
    %8 = memref.load %arg1[%c8] : memref<107xf32, #tpu.memory_space<smem>>
    %c9 = arith.constant 9 : index
    %9 = memref.load %arg1[%c9] : memref<107xf32, #tpu.memory_space<smem>>
    %c10 = arith.constant 10 : index
    %10 = memref.load %arg1[%c10] : memref<107xf32, #tpu.memory_space<smem>>
    %c11 = arith.constant 11 : index
    %11 = memref.load %arg1[%c11] : memref<107xf32, #tpu.memory_space<smem>>
    %c12 = arith.constant 12 : index
    %12 = memref.load %arg1[%c12] : memref<107xf32, #tpu.memory_space<smem>>
    %c13 = arith.constant 13 : index
    %13 = memref.load %arg1[%c13] : memref<107xf32, #tpu.memory_space<smem>>
    %c14 = arith.constant 14 : index
    %14 = memref.load %arg1[%c14] : memref<107xf32, #tpu.memory_space<smem>>
    %c15 = arith.constant 15 : index
    %15 = memref.load %arg1[%c15] : memref<107xf32, #tpu.memory_space<smem>>
    %c16 = arith.constant 16 : index
    %16 = memref.load %arg1[%c16] : memref<107xf32, #tpu.memory_space<smem>>
    %c17 = arith.constant 17 : index
    %17 = memref.load %arg1[%c17] : memref<107xf32, #tpu.memory_space<smem>>
    %c18 = arith.constant 18 : index
    %18 = memref.load %arg1[%c18] : memref<107xf32, #tpu.memory_space<smem>>
    %c19 = arith.constant 19 : index
    %19 = memref.load %arg1[%c19] : memref<107xf32, #tpu.memory_space<smem>>
    %c20 = arith.constant 20 : index
    %20 = memref.load %arg1[%c20] : memref<107xf32, #tpu.memory_space<smem>>
    %c21 = arith.constant 21 : index
    %21 = memref.load %arg1[%c21] : memref<107xf32, #tpu.memory_space<smem>>
    %c22 = arith.constant 22 : index
    %22 = memref.load %arg1[%c22] : memref<107xf32, #tpu.memory_space<smem>>
    %c23 = arith.constant 23 : index
    %23 = memref.load %arg1[%c23] : memref<107xf32, #tpu.memory_space<smem>>
    %c24 = arith.constant 24 : index
    %24 = memref.load %arg1[%c24] : memref<107xf32, #tpu.memory_space<smem>>
    %c25 = arith.constant 25 : index
    %25 = memref.load %arg1[%c25] : memref<107xf32, #tpu.memory_space<smem>>
    %c26 = arith.constant 26 : index
    %26 = memref.load %arg1[%c26] : memref<107xf32, #tpu.memory_space<smem>>
    %c27 = arith.constant 27 : index
    %27 = memref.load %arg1[%c27] : memref<107xf32, #tpu.memory_space<smem>>
    %c28 = arith.constant 28 : index
    %28 = memref.load %arg1[%c28] : memref<107xf32, #tpu.memory_space<smem>>
    %c29 = arith.constant 29 : index
    %29 = memref.load %arg1[%c29] : memref<107xf32, #tpu.memory_space<smem>>
    %c30 = arith.constant 30 : index
    %30 = memref.load %arg1[%c30] : memref<107xf32, #tpu.memory_space<smem>>
    %c31 = arith.constant 31 : index
    %31 = memref.load %arg1[%c31] : memref<107xf32, #tpu.memory_space<smem>>
    %c32 = arith.constant 32 : index
    %32 = memref.load %arg1[%c32] : memref<107xf32, #tpu.memory_space<smem>>
    %c33 = arith.constant 33 : index
    %33 = memref.load %arg1[%c33] : memref<107xf32, #tpu.memory_space<smem>>
    %c34 = arith.constant 34 : index
    %34 = memref.load %arg1[%c34] : memref<107xf32, #tpu.memory_space<smem>>
    %c35 = arith.constant 35 : index
    %35 = memref.load %arg1[%c35] : memref<107xf32, #tpu.memory_space<smem>>
    %c36 = arith.constant 36 : index
    %36 = memref.load %arg1[%c36] : memref<107xf32, #tpu.memory_space<smem>>
    %c37 = arith.constant 37 : index
    %37 = memref.load %arg1[%c37] : memref<107xf32, #tpu.memory_space<smem>>
    %c38 = arith.constant 38 : index
    %38 = memref.load %arg1[%c38] : memref<107xf32, #tpu.memory_space<smem>>
    %c39 = arith.constant 39 : index
    %39 = memref.load %arg1[%c39] : memref<107xf32, #tpu.memory_space<smem>>
    %c40 = arith.constant 40 : index
    %40 = memref.load %arg1[%c40] : memref<107xf32, #tpu.memory_space<smem>>
    %c41 = arith.constant 41 : index
    %41 = memref.load %arg1[%c41] : memref<107xf32, #tpu.memory_space<smem>>
    %c42 = arith.constant 42 : index
    %42 = memref.load %arg1[%c42] : memref<107xf32, #tpu.memory_space<smem>>
    %c43 = arith.constant 43 : index
    %43 = memref.load %arg1[%c43] : memref<107xf32, #tpu.memory_space<smem>>
    %c44 = arith.constant 44 : index
    %44 = memref.load %arg1[%c44] : memref<107xf32, #tpu.memory_space<smem>>
    %c45 = arith.constant 45 : index
    %45 = memref.load %arg1[%c45] : memref<107xf32, #tpu.memory_space<smem>>
    %c46 = arith.constant 46 : index
    %46 = memref.load %arg1[%c46] : memref<107xf32, #tpu.memory_space<smem>>
    %c47 = arith.constant 47 : index
    %47 = memref.load %arg1[%c47] : memref<107xf32, #tpu.memory_space<smem>>
    %c48 = arith.constant 48 : index
    %48 = memref.load %arg1[%c48] : memref<107xf32, #tpu.memory_space<smem>>
    %c49 = arith.constant 49 : index
    %49 = memref.load %arg1[%c49] : memref<107xf32, #tpu.memory_space<smem>>
    %c50 = arith.constant 50 : index
    %50 = memref.load %arg1[%c50] : memref<107xf32, #tpu.memory_space<smem>>
    %c51 = arith.constant 51 : index
    %51 = memref.load %arg1[%c51] : memref<107xf32, #tpu.memory_space<smem>>
    %c52 = arith.constant 52 : index
    %52 = memref.load %arg1[%c52] : memref<107xf32, #tpu.memory_space<smem>>
    %c53 = arith.constant 53 : index
    %53 = memref.load %arg1[%c53] : memref<107xf32, #tpu.memory_space<smem>>
    %c54 = arith.constant 54 : index
    %54 = memref.load %arg1[%c54] : memref<107xf32, #tpu.memory_space<smem>>
    %c55 = arith.constant 55 : index
    %55 = memref.load %arg1[%c55] : memref<107xf32, #tpu.memory_space<smem>>
    %c56 = arith.constant 56 : index
    %56 = memref.load %arg1[%c56] : memref<107xf32, #tpu.memory_space<smem>>
    %c57 = arith.constant 57 : index
    %57 = memref.load %arg1[%c57] : memref<107xf32, #tpu.memory_space<smem>>
    %c58 = arith.constant 58 : index
    %58 = memref.load %arg1[%c58] : memref<107xf32, #tpu.memory_space<smem>>
    %c59 = arith.constant 59 : index
    %59 = memref.load %arg1[%c59] : memref<107xf32, #tpu.memory_space<smem>>
    %c60 = arith.constant 60 : index
    %60 = memref.load %arg1[%c60] : memref<107xf32, #tpu.memory_space<smem>>
    %c61 = arith.constant 61 : index
    %61 = memref.load %arg1[%c61] : memref<107xf32, #tpu.memory_space<smem>>
    %c62 = arith.constant 62 : index
    %62 = memref.load %arg1[%c62] : memref<107xf32, #tpu.memory_space<smem>>
    %c63 = arith.constant 63 : index
    %63 = memref.load %arg1[%c63] : memref<107xf32, #tpu.memory_space<smem>>
    %c64 = arith.constant 64 : index
    %64 = memref.load %arg1[%c64] : memref<107xf32, #tpu.memory_space<smem>>
    %c65 = arith.constant 65 : index
    %65 = memref.load %arg1[%c65] : memref<107xf32, #tpu.memory_space<smem>>
    %c66 = arith.constant 66 : index
    %66 = memref.load %arg1[%c66] : memref<107xf32, #tpu.memory_space<smem>>
    %c67 = arith.constant 67 : index
    %67 = memref.load %arg1[%c67] : memref<107xf32, #tpu.memory_space<smem>>
    %c68 = arith.constant 68 : index
    %68 = memref.load %arg1[%c68] : memref<107xf32, #tpu.memory_space<smem>>
    %c69 = arith.constant 69 : index
    %69 = memref.load %arg1[%c69] : memref<107xf32, #tpu.memory_space<smem>>
    %c70 = arith.constant 70 : index
    %70 = memref.load %arg1[%c70] : memref<107xf32, #tpu.memory_space<smem>>
    %c71 = arith.constant 71 : index
    %71 = memref.load %arg1[%c71] : memref<107xf32, #tpu.memory_space<smem>>
    %c72 = arith.constant 72 : index
    %72 = memref.load %arg1[%c72] : memref<107xf32, #tpu.memory_space<smem>>
    %c73 = arith.constant 73 : index
    %73 = memref.load %arg1[%c73] : memref<107xf32, #tpu.memory_space<smem>>
    %c74 = arith.constant 74 : index
    %74 = memref.load %arg1[%c74] : memref<107xf32, #tpu.memory_space<smem>>
    %c75 = arith.constant 75 : index
    %75 = memref.load %arg1[%c75] : memref<107xf32, #tpu.memory_space<smem>>
    %c76 = arith.constant 76 : index
    %76 = memref.load %arg1[%c76] : memref<107xf32, #tpu.memory_space<smem>>
    %c77 = arith.constant 77 : index
    %77 = memref.load %arg1[%c77] : memref<107xf32, #tpu.memory_space<smem>>
    %c78 = arith.constant 78 : index
    %78 = memref.load %arg1[%c78] : memref<107xf32, #tpu.memory_space<smem>>
    %c79 = arith.constant 79 : index
    %79 = memref.load %arg1[%c79] : memref<107xf32, #tpu.memory_space<smem>>
    %c80 = arith.constant 80 : index
    %80 = memref.load %arg1[%c80] : memref<107xf32, #tpu.memory_space<smem>>
    %c81 = arith.constant 81 : index
    %81 = memref.load %arg1[%c81] : memref<107xf32, #tpu.memory_space<smem>>
    %c82 = arith.constant 82 : index
    %82 = memref.load %arg1[%c82] : memref<107xf32, #tpu.memory_space<smem>>
    %c83 = arith.constant 83 : index
    %83 = memref.load %arg1[%c83] : memref<107xf32, #tpu.memory_space<smem>>
    %c84 = arith.constant 84 : index
    %84 = memref.load %arg1[%c84] : memref<107xf32, #tpu.memory_space<smem>>
    %c85 = arith.constant 85 : index
    %85 = memref.load %arg1[%c85] : memref<107xf32, #tpu.memory_space<smem>>
    %c86 = arith.constant 86 : index
    %86 = memref.load %arg1[%c86] : memref<107xf32, #tpu.memory_space<smem>>
    %c87 = arith.constant 87 : index
    %87 = memref.load %arg1[%c87] : memref<107xf32, #tpu.memory_space<smem>>
    %c88 = arith.constant 88 : index
    %88 = memref.load %arg1[%c88] : memref<107xf32, #tpu.memory_space<smem>>
    %c89 = arith.constant 89 : index
    %89 = memref.load %arg1[%c89] : memref<107xf32, #tpu.memory_space<smem>>
    %c90 = arith.constant 90 : index
    %90 = memref.load %arg1[%c90] : memref<107xf32, #tpu.memory_space<smem>>
    %c91 = arith.constant 91 : index
    %91 = memref.load %arg1[%c91] : memref<107xf32, #tpu.memory_space<smem>>
    %c92 = arith.constant 92 : index
    %92 = memref.load %arg1[%c92] : memref<107xf32, #tpu.memory_space<smem>>
    %c93 = arith.constant 93 : index
    %93 = memref.load %arg1[%c93] : memref<107xf32, #tpu.memory_space<smem>>
    %c94 = arith.constant 94 : index
    %94 = memref.load %arg1[%c94] : memref<107xf32, #tpu.memory_space<smem>>
    %c95 = arith.constant 95 : index
    %95 = memref.load %arg1[%c95] : memref<107xf32, #tpu.memory_space<smem>>
    %c96 = arith.constant 96 : index
    %96 = memref.load %arg1[%c96] : memref<107xf32, #tpu.memory_space<smem>>
    %c97 = arith.constant 97 : index
    %97 = memref.load %arg1[%c97] : memref<107xf32, #tpu.memory_space<smem>>
    %c98 = arith.constant 98 : index
    %98 = memref.load %arg1[%c98] : memref<107xf32, #tpu.memory_space<smem>>
    %c99 = arith.constant 99 : index
    %99 = memref.load %arg1[%c99] : memref<107xf32, #tpu.memory_space<smem>>
    %c100 = arith.constant 100 : index
    %100 = memref.load %arg1[%c100] : memref<107xf32, #tpu.memory_space<smem>>
    %c101 = arith.constant 101 : index
    %101 = memref.load %arg1[%c101] : memref<107xf32, #tpu.memory_space<smem>>
    %c102 = arith.constant 102 : index
    %102 = memref.load %arg1[%c102] : memref<107xf32, #tpu.memory_space<smem>>
    %c103 = arith.constant 103 : index
    %103 = memref.load %arg1[%c103] : memref<107xf32, #tpu.memory_space<smem>>
    %c104 = arith.constant 104 : index
    %104 = memref.load %arg1[%c104] : memref<107xf32, #tpu.memory_space<smem>>
    %c105 = arith.constant 105 : index
    %105 = memref.load %arg1[%c105] : memref<107xf32, #tpu.memory_space<smem>>
    %c106 = arith.constant 106 : index
    %106 = memref.load %arg1[%c106] : memref<107xf32, #tpu.memory_space<smem>>
    %c0_i32 = arith.constant 0 : i32
    %c16_i32 = arith.constant 16 : i32
    %107 = arith.muli %c0_i32, %c16_i32 : i32
    %108 = tpu.assume_multiple %107, 16 : i32
    %109 = arith.index_cast %108 : i32 to index
    %c0_0 = arith.constant 0 : index
    %110 = vector.load %arg2[%109, %c0_0] : memref<32x128xf32, #tpu.memory_space<vmem>>, vector<16x128xf32>
    %111 = vector.broadcast %0 : f32 to vector<16x128xf32>
    %112 = arith.mulf %110, %111 : vector<16x128xf32>
    %113 = vector.broadcast %20 : f32 to vector<16x128xf32>
    %114 = arith.addf %112, %113 : vector<16x128xf32>
    %cst = arith.constant 0.00999999977 : f32
    %115 = vector.broadcast %cst : f32 to vector<16x128xf32>
    %116 = arith.mulf %115, %114 : vector<16x128xf32>
    %117 = arith.maximumf %114, %116 : vector<16x128xf32>
    %118 = vector.broadcast %40 : f32 to vector<16x128xf32>
    %119 = arith.mulf %117, %118 : vector<16x128xf32>
    %120 = vector.broadcast %100 : f32 to vector<16x128xf32>
    %121 = arith.addf %119, %120 : vector<16x128xf32>
    %122 = vector.broadcast %41 : f32 to vector<16x128xf32>
    %123 = arith.mulf %117, %122 : vector<16x128xf32>
    %124 = vector.broadcast %101 : f32 to vector<16x128xf32>
    %125 = arith.addf %123, %124 : vector<16x128xf32>
    %126 = vector.broadcast %42 : f32 to vector<16x128xf32>
    %127 = arith.mulf %117, %126 : vector<16x128xf32>
    %128 = vector.broadcast %102 : f32 to vector<16x128xf32>
    %129 = arith.addf %127, %128 : vector<16x128xf32>
    %130 = vector.broadcast %1 : f32 to vector<16x128xf32>
    %131 = arith.mulf %110, %130 : vector<16x128xf32>
    %132 = vector.broadcast %21 : f32 to vector<16x128xf32>
    %133 = arith.addf %131, %132 : vector<16x128xf32>
    %cst_1 = arith.constant 0.00999999977 : f32
    %134 = vector.broadcast %cst_1 : f32 to vector<16x128xf32>
    %135 = arith.mulf %134, %133 : vector<16x128xf32>
    %136 = arith.maximumf %133, %135 : vector<16x128xf32>
    %137 = vector.broadcast %43 : f32 to vector<16x128xf32>
    %138 = arith.mulf %136, %137 : vector<16x128xf32>
    %139 = arith.addf %121, %138 : vector<16x128xf32>
    %140 = vector.broadcast %44 : f32 to vector<16x128xf32>
    %141 = arith.mulf %136, %140 : vector<16x128xf32>
    %142 = arith.addf %125, %141 : vector<16x128xf32>
    %143 = vector.broadcast %45 : f32 to vector<16x128xf32>
    %144 = arith.mulf %136, %143 : vector<16x128xf32>
    %145 = arith.addf %129, %144 : vector<16x128xf32>
    %146 = vector.broadcast %2 : f32 to vector<16x128xf32>
    %147 = arith.mulf %110, %146 : vector<16x128xf32>
    %148 = vector.broadcast %22 : f32 to vector<16x128xf32>
    %149 = arith.addf %147, %148 : vector<16x128xf32>
    %cst_2 = arith.constant 0.00999999977 : f32
    %150 = vector.broadcast %cst_2 : f32 to vector<16x128xf32>
    %151 = arith.mulf %150, %149 : vector<16x128xf32>
    %152 = arith.maximumf %149, %151 : vector<16x128xf32>
    %153 = vector.broadcast %46 : f32 to vector<16x128xf32>
    %154 = arith.mulf %152, %153 : vector<16x128xf32>
    %155 = arith.addf %139, %154 : vector<16x128xf32>
    %156 = vector.broadcast %47 : f32 to vector<16x128xf32>
    %157 = arith.mulf %152, %156 : vector<16x128xf32>
    %158 = arith.addf %142, %157 : vector<16x128xf32>
    %159 = vector.broadcast %48 : f32 to vector<16x128xf32>
    %160 = arith.mulf %152, %159 : vector<16x128xf32>
    %161 = arith.addf %145, %160 : vector<16x128xf32>
    %162 = vector.broadcast %3 : f32 to vector<16x128xf32>
    %163 = arith.mulf %110, %162 : vector<16x128xf32>
    %164 = vector.broadcast %23 : f32 to vector<16x128xf32>
    %165 = arith.addf %163, %164 : vector<16x128xf32>
    %cst_3 = arith.constant 0.00999999977 : f32
    %166 = vector.broadcast %cst_3 : f32 to vector<16x128xf32>
    %167 = arith.mulf %166, %165 : vector<16x128xf32>
    %168 = arith.maximumf %165, %167 : vector<16x128xf32>
    %169 = vector.broadcast %49 : f32 to vector<16x128xf32>
    %170 = arith.mulf %168, %169 : vector<16x128xf32>
    %171 = arith.addf %155, %170 : vector<16x128xf32>
    %172 = vector.broadcast %50 : f32 to vector<16x128xf32>
    %173 = arith.mulf %168, %172 : vector<16x128xf32>
    %174 = arith.addf %158, %173 : vector<16x128xf32>
    %175 = vector.broadcast %51 : f32 to vector<16x128xf32>
    %176 = arith.mulf %168, %175 : vector<16x128xf32>
    %177 = arith.addf %161, %176 : vector<16x128xf32>
    %178 = vector.broadcast %4 : f32 to vector<16x128xf32>
    %179 = arith.mulf %110, %178 : vector<16x128xf32>
    %180 = vector.broadcast %24 : f32 to vector<16x128xf32>
    %181 = arith.addf %179, %180 : vector<16x128xf32>
    %cst_4 = arith.constant 0.00999999977 : f32
    %182 = vector.broadcast %cst_4 : f32 to vector<16x128xf32>
    %183 = arith.mulf %182, %181 : vector<16x128xf32>
    %184 = arith.maximumf %181, %183 : vector<16x128xf32>
    %185 = vector.broadcast %52 : f32 to vector<16x128xf32>
    %186 = arith.mulf %184, %185 : vector<16x128xf32>
    %187 = arith.addf %171, %186 : vector<16x128xf32>
    %188 = vector.broadcast %53 : f32 to vector<16x128xf32>
    %189 = arith.mulf %184, %188 : vector<16x128xf32>
    %190 = arith.addf %174, %189 : vector<16x128xf32>
    %191 = vector.broadcast %54 : f32 to vector<16x128xf32>
    %192 = arith.mulf %184, %191 : vector<16x128xf32>
    %193 = arith.addf %177, %192 : vector<16x128xf32>
    %194 = vector.broadcast %5 : f32 to vector<16x128xf32>
    %195 = arith.mulf %110, %194 : vector<16x128xf32>
    %196 = vector.broadcast %25 : f32 to vector<16x128xf32>
    %197 = arith.addf %195, %196 : vector<16x128xf32>
    %cst_5 = arith.constant 0.00999999977 : f32
    %198 = vector.broadcast %cst_5 : f32 to vector<16x128xf32>
    %199 = arith.mulf %198, %197 : vector<16x128xf32>
    %200 = arith.maximumf %197, %199 : vector<16x128xf32>
    %201 = vector.broadcast %55 : f32 to vector<16x128xf32>
    %202 = arith.mulf %200, %201 : vector<16x128xf32>
    %203 = arith.addf %187, %202 : vector<16x128xf32>
    %204 = vector.broadcast %56 : f32 to vector<16x128xf32>
    %205 = arith.mulf %200, %204 : vector<16x128xf32>
    %206 = arith.addf %190, %205 : vector<16x128xf32>
    %207 = vector.broadcast %57 : f32 to vector<16x128xf32>
    %208 = arith.mulf %200, %207 : vector<16x128xf32>
    %209 = arith.addf %193, %208 : vector<16x128xf32>
    %210 = vector.broadcast %6 : f32 to vector<16x128xf32>
    %211 = arith.mulf %110, %210 : vector<16x128xf32>
    %212 = vector.broadcast %26 : f32 to vector<16x128xf32>
    %213 = arith.addf %211, %212 : vector<16x128xf32>
    %cst_6 = arith.constant 0.00999999977 : f32
    %214 = vector.broadcast %cst_6 : f32 to vector<16x128xf32>
    %215 = arith.mulf %214, %213 : vector<16x128xf32>
    %216 = arith.maximumf %213, %215 : vector<16x128xf32>
    %217 = vector.broadcast %58 : f32 to vector<16x128xf32>
    %218 = arith.mulf %216, %217 : vector<16x128xf32>
    %219 = arith.addf %203, %218 : vector<16x128xf32>
    %220 = vector.broadcast %59 : f32 to vector<16x128xf32>
    %221 = arith.mulf %216, %220 : vector<16x128xf32>
    %222 = arith.addf %206, %221 : vector<16x128xf32>
    %223 = vector.broadcast %60 : f32 to vector<16x128xf32>
    %224 = arith.mulf %216, %223 : vector<16x128xf32>
    %225 = arith.addf %209, %224 : vector<16x128xf32>
    %226 = vector.broadcast %7 : f32 to vector<16x128xf32>
    %227 = arith.mulf %110, %226 : vector<16x128xf32>
    %228 = vector.broadcast %27 : f32 to vector<16x128xf32>
    %229 = arith.addf %227, %228 : vector<16x128xf32>
    %cst_7 = arith.constant 0.00999999977 : f32
    %230 = vector.broadcast %cst_7 : f32 to vector<16x128xf32>
    %231 = arith.mulf %230, %229 : vector<16x128xf32>
    %232 = arith.maximumf %229, %231 : vector<16x128xf32>
    %233 = vector.broadcast %61 : f32 to vector<16x128xf32>
    %234 = arith.mulf %232, %233 : vector<16x128xf32>
    %235 = arith.addf %219, %234 : vector<16x128xf32>
    %236 = vector.broadcast %62 : f32 to vector<16x128xf32>
    %237 = arith.mulf %232, %236 : vector<16x128xf32>
    %238 = arith.addf %222, %237 : vector<16x128xf32>
    %239 = vector.broadcast %63 : f32 to vector<16x128xf32>
    %240 = arith.mulf %232, %239 : vector<16x128xf32>
    %241 = arith.addf %225, %240 : vector<16x128xf32>
    %242 = vector.broadcast %8 : f32 to vector<16x128xf32>
    %243 = arith.mulf %110, %242 : vector<16x128xf32>
    %244 = vector.broadcast %28 : f32 to vector<16x128xf32>
    %245 = arith.addf %243, %244 : vector<16x128xf32>
    %cst_8 = arith.constant 0.00999999977 : f32
    %246 = vector.broadcast %cst_8 : f32 to vector<16x128xf32>
    %247 = arith.mulf %246, %245 : vector<16x128xf32>
    %248 = arith.maximumf %245, %247 : vector<16x128xf32>
    %249 = vector.broadcast %64 : f32 to vector<16x128xf32>
    %250 = arith.mulf %248, %249 : vector<16x128xf32>
    %251 = arith.addf %235, %250 : vector<16x128xf32>
    %252 = vector.broadcast %65 : f32 to vector<16x128xf32>
    %253 = arith.mulf %248, %252 : vector<16x128xf32>
    %254 = arith.addf %238, %253 : vector<16x128xf32>
    %255 = vector.broadcast %66 : f32 to vector<16x128xf32>
    %256 = arith.mulf %248, %255 : vector<16x128xf32>
    %257 = arith.addf %241, %256 : vector<16x128xf32>
    %258 = vector.broadcast %9 : f32 to vector<16x128xf32>
    %259 = arith.mulf %110, %258 : vector<16x128xf32>
    %260 = vector.broadcast %29 : f32 to vector<16x128xf32>
    %261 = arith.addf %259, %260 : vector<16x128xf32>
    %cst_9 = arith.constant 0.00999999977 : f32
    %262 = vector.broadcast %cst_9 : f32 to vector<16x128xf32>
    %263 = arith.mulf %262, %261 : vector<16x128xf32>
    %264 = arith.maximumf %261, %263 : vector<16x128xf32>
    %265 = vector.broadcast %67 : f32 to vector<16x128xf32>
    %266 = arith.mulf %264, %265 : vector<16x128xf32>
    %267 = arith.addf %251, %266 : vector<16x128xf32>
    %268 = vector.broadcast %68 : f32 to vector<16x128xf32>
    %269 = arith.mulf %264, %268 : vector<16x128xf32>
    %270 = arith.addf %254, %269 : vector<16x128xf32>
    %271 = vector.broadcast %69 : f32 to vector<16x128xf32>
    %272 = arith.mulf %264, %271 : vector<16x128xf32>
    %273 = arith.addf %257, %272 : vector<16x128xf32>
    %274 = vector.broadcast %10 : f32 to vector<16x128xf32>
    %275 = arith.mulf %110, %274 : vector<16x128xf32>
    %276 = vector.broadcast %30 : f32 to vector<16x128xf32>
    %277 = arith.addf %275, %276 : vector<16x128xf32>
    %cst_10 = arith.constant 0.00999999977 : f32
    %278 = vector.broadcast %cst_10 : f32 to vector<16x128xf32>
    %279 = arith.mulf %278, %277 : vector<16x128xf32>
    %280 = arith.maximumf %277, %279 : vector<16x128xf32>
    %281 = vector.broadcast %70 : f32 to vector<16x128xf32>
    %282 = arith.mulf %280, %281 : vector<16x128xf32>
    %283 = arith.addf %267, %282 : vector<16x128xf32>
    %284 = vector.broadcast %71 : f32 to vector<16x128xf32>
    %285 = arith.mulf %280, %284 : vector<16x128xf32>
    %286 = arith.addf %270, %285 : vector<16x128xf32>
    %287 = vector.broadcast %72 : f32 to vector<16x128xf32>
    %288 = arith.mulf %280, %287 : vector<16x128xf32>
    %289 = arith.addf %273, %288 : vector<16x128xf32>
    %290 = vector.broadcast %11 : f32 to vector<16x128xf32>
    %291 = arith.mulf %110, %290 : vector<16x128xf32>
    %292 = vector.broadcast %31 : f32 to vector<16x128xf32>
    %293 = arith.addf %291, %292 : vector<16x128xf32>
    %cst_11 = arith.constant 0.00999999977 : f32
    %294 = vector.broadcast %cst_11 : f32 to vector<16x128xf32>
    %295 = arith.mulf %294, %293 : vector<16x128xf32>
    %296 = arith.maximumf %293, %295 : vector<16x128xf32>
    %297 = vector.broadcast %73 : f32 to vector<16x128xf32>
    %298 = arith.mulf %296, %297 : vector<16x128xf32>
    %299 = arith.addf %283, %298 : vector<16x128xf32>
    %300 = vector.broadcast %74 : f32 to vector<16x128xf32>
    %301 = arith.mulf %296, %300 : vector<16x128xf32>
    %302 = arith.addf %286, %301 : vector<16x128xf32>
    %303 = vector.broadcast %75 : f32 to vector<16x128xf32>
    %304 = arith.mulf %296, %303 : vector<16x128xf32>
    %305 = arith.addf %289, %304 : vector<16x128xf32>
    %306 = vector.broadcast %12 : f32 to vector<16x128xf32>
    %307 = arith.mulf %110, %306 : vector<16x128xf32>
    %308 = vector.broadcast %32 : f32 to vector<16x128xf32>
    %309 = arith.addf %307, %308 : vector<16x128xf32>
    %cst_12 = arith.constant 0.00999999977 : f32
    %310 = vector.broadcast %cst_12 : f32 to vector<16x128xf32>
    %311 = arith.mulf %310, %309 : vector<16x128xf32>
    %312 = arith.maximumf %309, %311 : vector<16x128xf32>
    %313 = vector.broadcast %76 : f32 to vector<16x128xf32>
    %314 = arith.mulf %312, %313 : vector<16x128xf32>
    %315 = arith.addf %299, %314 : vector<16x128xf32>
    %316 = vector.broadcast %77 : f32 to vector<16x128xf32>
    %317 = arith.mulf %312, %316 : vector<16x128xf32>
    %318 = arith.addf %302, %317 : vector<16x128xf32>
    %319 = vector.broadcast %78 : f32 to vector<16x128xf32>
    %320 = arith.mulf %312, %319 : vector<16x128xf32>
    %321 = arith.addf %305, %320 : vector<16x128xf32>
    %322 = vector.broadcast %13 : f32 to vector<16x128xf32>
    %323 = arith.mulf %110, %322 : vector<16x128xf32>
    %324 = vector.broadcast %33 : f32 to vector<16x128xf32>
    %325 = arith.addf %323, %324 : vector<16x128xf32>
    %cst_13 = arith.constant 0.00999999977 : f32
    %326 = vector.broadcast %cst_13 : f32 to vector<16x128xf32>
    %327 = arith.mulf %326, %325 : vector<16x128xf32>
    %328 = arith.maximumf %325, %327 : vector<16x128xf32>
    %329 = vector.broadcast %79 : f32 to vector<16x128xf32>
    %330 = arith.mulf %328, %329 : vector<16x128xf32>
    %331 = arith.addf %315, %330 : vector<16x128xf32>
    %332 = vector.broadcast %80 : f32 to vector<16x128xf32>
    %333 = arith.mulf %328, %332 : vector<16x128xf32>
    %334 = arith.addf %318, %333 : vector<16x128xf32>
    %335 = vector.broadcast %81 : f32 to vector<16x128xf32>
    %336 = arith.mulf %328, %335 : vector<16x128xf32>
    %337 = arith.addf %321, %336 : vector<16x128xf32>
    %338 = vector.broadcast %14 : f32 to vector<16x128xf32>
    %339 = arith.mulf %110, %338 : vector<16x128xf32>
    %340 = vector.broadcast %34 : f32 to vector<16x128xf32>
    %341 = arith.addf %339, %340 : vector<16x128xf32>
    %cst_14 = arith.constant 0.00999999977 : f32
    %342 = vector.broadcast %cst_14 : f32 to vector<16x128xf32>
    %343 = arith.mulf %342, %341 : vector<16x128xf32>
    %344 = arith.maximumf %341, %343 : vector<16x128xf32>
    %345 = vector.broadcast %82 : f32 to vector<16x128xf32>
    %346 = arith.mulf %344, %345 : vector<16x128xf32>
    %347 = arith.addf %331, %346 : vector<16x128xf32>
    %348 = vector.broadcast %83 : f32 to vector<16x128xf32>
    %349 = arith.mulf %344, %348 : vector<16x128xf32>
    %350 = arith.addf %334, %349 : vector<16x128xf32>
    %351 = vector.broadcast %84 : f32 to vector<16x128xf32>
    %352 = arith.mulf %344, %351 : vector<16x128xf32>
    %353 = arith.addf %337, %352 : vector<16x128xf32>
    %354 = vector.broadcast %15 : f32 to vector<16x128xf32>
    %355 = arith.mulf %110, %354 : vector<16x128xf32>
    %356 = vector.broadcast %35 : f32 to vector<16x128xf32>
    %357 = arith.addf %355, %356 : vector<16x128xf32>
    %cst_15 = arith.constant 0.00999999977 : f32
    %358 = vector.broadcast %cst_15 : f32 to vector<16x128xf32>
    %359 = arith.mulf %358, %357 : vector<16x128xf32>
    %360 = arith.maximumf %357, %359 : vector<16x128xf32>
    %361 = vector.broadcast %85 : f32 to vector<16x128xf32>
    %362 = arith.mulf %360, %361 : vector<16x128xf32>
    %363 = arith.addf %347, %362 : vector<16x128xf32>
    %364 = vector.broadcast %86 : f32 to vector<16x128xf32>
    %365 = arith.mulf %360, %364 : vector<16x128xf32>
    %366 = arith.addf %350, %365 : vector<16x128xf32>
    %367 = vector.broadcast %87 : f32 to vector<16x128xf32>
    %368 = arith.mulf %360, %367 : vector<16x128xf32>
    %369 = arith.addf %353, %368 : vector<16x128xf32>
    %370 = vector.broadcast %16 : f32 to vector<16x128xf32>
    %371 = arith.mulf %110, %370 : vector<16x128xf32>
    %372 = vector.broadcast %36 : f32 to vector<16x128xf32>
    %373 = arith.addf %371, %372 : vector<16x128xf32>
    %cst_16 = arith.constant 0.00999999977 : f32
    %374 = vector.broadcast %cst_16 : f32 to vector<16x128xf32>
    %375 = arith.mulf %374, %373 : vector<16x128xf32>
    %376 = arith.maximumf %373, %375 : vector<16x128xf32>
    %377 = vector.broadcast %88 : f32 to vector<16x128xf32>
    %378 = arith.mulf %376, %377 : vector<16x128xf32>
    %379 = arith.addf %363, %378 : vector<16x128xf32>
    %380 = vector.broadcast %89 : f32 to vector<16x128xf32>
    %381 = arith.mulf %376, %380 : vector<16x128xf32>
    %382 = arith.addf %366, %381 : vector<16x128xf32>
    %383 = vector.broadcast %90 : f32 to vector<16x128xf32>
    %384 = arith.mulf %376, %383 : vector<16x128xf32>
    %385 = arith.addf %369, %384 : vector<16x128xf32>
    %386 = vector.broadcast %17 : f32 to vector<16x128xf32>
    %387 = arith.mulf %110, %386 : vector<16x128xf32>
    %388 = vector.broadcast %37 : f32 to vector<16x128xf32>
    %389 = arith.addf %387, %388 : vector<16x128xf32>
    %cst_17 = arith.constant 0.00999999977 : f32
    %390 = vector.broadcast %cst_17 : f32 to vector<16x128xf32>
    %391 = arith.mulf %390, %389 : vector<16x128xf32>
    %392 = arith.maximumf %389, %391 : vector<16x128xf32>
    %393 = vector.broadcast %91 : f32 to vector<16x128xf32>
    %394 = arith.mulf %392, %393 : vector<16x128xf32>
    %395 = arith.addf %379, %394 : vector<16x128xf32>
    %396 = vector.broadcast %92 : f32 to vector<16x128xf32>
    %397 = arith.mulf %392, %396 : vector<16x128xf32>
    %398 = arith.addf %382, %397 : vector<16x128xf32>
    %399 = vector.broadcast %93 : f32 to vector<16x128xf32>
    %400 = arith.mulf %392, %399 : vector<16x128xf32>
    %401 = arith.addf %385, %400 : vector<16x128xf32>
    %402 = vector.broadcast %18 : f32 to vector<16x128xf32>
    %403 = arith.mulf %110, %402 : vector<16x128xf32>
    %404 = vector.broadcast %38 : f32 to vector<16x128xf32>
    %405 = arith.addf %403, %404 : vector<16x128xf32>
    %cst_18 = arith.constant 0.00999999977 : f32
    %406 = vector.broadcast %cst_18 : f32 to vector<16x128xf32>
    %407 = arith.mulf %406, %405 : vector<16x128xf32>
    %408 = arith.maximumf %405, %407 : vector<16x128xf32>
    %409 = vector.broadcast %94 : f32 to vector<16x128xf32>
    %410 = arith.mulf %408, %409 : vector<16x128xf32>
    %411 = arith.addf %395, %410 : vector<16x128xf32>
    %412 = vector.broadcast %95 : f32 to vector<16x128xf32>
    %413 = arith.mulf %408, %412 : vector<16x128xf32>
    %414 = arith.addf %398, %413 : vector<16x128xf32>
    %415 = vector.broadcast %96 : f32 to vector<16x128xf32>
    %416 = arith.mulf %408, %415 : vector<16x128xf32>
    %417 = arith.addf %401, %416 : vector<16x128xf32>
    %418 = vector.broadcast %19 : f32 to vector<16x128xf32>
    %419 = arith.mulf %110, %418 : vector<16x128xf32>
    %420 = vector.broadcast %39 : f32 to vector<16x128xf32>
    %421 = arith.addf %419, %420 : vector<16x128xf32>
    %cst_19 = arith.constant 0.00999999977 : f32
    %422 = vector.broadcast %cst_19 : f32 to vector<16x128xf32>
    %423 = arith.mulf %422, %421 : vector<16x128xf32>
    %424 = arith.maximumf %421, %423 : vector<16x128xf32>
    %425 = vector.broadcast %97 : f32 to vector<16x128xf32>
    %426 = arith.mulf %424, %425 : vector<16x128xf32>
    %427 = arith.addf %411, %426 : vector<16x128xf32>
    %428 = vector.broadcast %98 : f32 to vector<16x128xf32>
    %429 = arith.mulf %424, %428 : vector<16x128xf32>
    %430 = arith.addf %414, %429 : vector<16x128xf32>
    %431 = vector.broadcast %99 : f32 to vector<16x128xf32>
    %432 = arith.mulf %424, %431 : vector<16x128xf32>
    %433 = arith.addf %417, %432 : vector<16x128xf32>
    %cst_20 = arith.constant 0.00999999977 : f32
    %434 = vector.broadcast %cst_20 : f32 to vector<16x128xf32>
    %435 = arith.mulf %434, %427 : vector<16x128xf32>
    %436 = arith.maximumf %427, %435 : vector<16x128xf32>
    %437 = vector.broadcast %103 : f32 to vector<16x128xf32>
    %438 = arith.mulf %436, %437 : vector<16x128xf32>
    %439 = vector.broadcast %106 : f32 to vector<16x128xf32>
    %440 = arith.addf %438, %439 : vector<16x128xf32>
    %cst_21 = arith.constant 0.00999999977 : f32
    %441 = vector.broadcast %cst_21 : f32 to vector<16x128xf32>
    %442 = arith.mulf %441, %430 : vector<16x128xf32>
    %443 = arith.maximumf %430, %442 : vector<16x128xf32>
    %444 = vector.broadcast %104 : f32 to vector<16x128xf32>
    %445 = arith.mulf %443, %444 : vector<16x128xf32>
    %446 = arith.addf %440, %445 : vector<16x128xf32>
    %cst_22 = arith.constant 0.00999999977 : f32
    %447 = vector.broadcast %cst_22 : f32 to vector<16x128xf32>
    %448 = arith.mulf %447, %433 : vector<16x128xf32>
    %449 = arith.maximumf %433, %448 : vector<16x128xf32>
    %450 = vector.broadcast %105 : f32 to vector<16x128xf32>
    %451 = arith.mulf %449, %450 : vector<16x128xf32>
    %452 = arith.addf %446, %451 : vector<16x128xf32>
    %453 = arith.index_cast %108 : i32 to index
    %c0_23 = arith.constant 0 : index
    %454 = vector.load %arg3[%453, %c0_23] : memref<32x128xf32, #tpu.memory_space<vmem>>, vector<16x128xf32>
    tpu.vector_store %arg3[%453, %c0_23], %452 {strides = array<i32>} : memref<32x128xf32, #tpu.memory_space<vmem>>, vector<16x128xf32>,
    %c1_i32 = arith.constant 1 : i32
    %c16_i32_24 = arith.constant 16 : i32
    %455 = arith.muli %c1_i32, %c16_i32_24 : i32
    %456 = tpu.assume_multiple %455, 16 : i32
    %457 = arith.index_cast %456 : i32 to index
    %c0_25 = arith.constant 0 : index
    %458 = vector.load %arg2[%457, %c0_25] : memref<32x128xf32, #tpu.memory_space<vmem>>, vector<16x128xf32>
    %459 = vector.broadcast %0 : f32 to vector<16x128xf32>
    %460 = arith.mulf %458, %459 : vector<16x128xf32>
    %461 = vector.broadcast %20 : f32 to vector<16x128xf32>
    %462 = arith.addf %460, %461 : vector<16x128xf32>
    %cst_26 = arith.constant 0.00999999977 : f32
    %463 = vector.broadcast %cst_26 : f32 to vector<16x128xf32>
    %464 = arith.mulf %463, %462 : vector<16x128xf32>
    %465 = arith.maximumf %462, %464 : vector<16x128xf32>
    %466 = vector.broadcast %40 : f32 to vector<16x128xf32>
    %467 = arith.mulf %465, %466 : vector<16x128xf32>
    %468 = vector.broadcast %100 : f32 to vector<16x128xf32>
    %469 = arith.addf %467, %468 : vector<16x128xf32>
    %470 = vector.broadcast %41 : f32 to vector<16x128xf32>
    %471 = arith.mulf %465, %470 : vector<16x128xf32>
    %472 = vector.broadcast %101 : f32 to vector<16x128xf32>
    %473 = arith.addf %471, %472 : vector<16x128xf32>
    %474 = vector.broadcast %42 : f32 to vector<16x128xf32>
    %475 = arith.mulf %465, %474 : vector<16x128xf32>
    %476 = vector.broadcast %102 : f32 to vector<16x128xf32>
    %477 = arith.addf %475, %476 : vector<16x128xf32>
    %478 = vector.broadcast %1 : f32 to vector<16x128xf32>
    %479 = arith.mulf %458, %478 : vector<16x128xf32>
    %480 = vector.broadcast %21 : f32 to vector<16x128xf32>
    %481 = arith.addf %479, %480 : vector<16x128xf32>
    %cst_27 = arith.constant 0.00999999977 : f32
    %482 = vector.broadcast %cst_27 : f32 to vector<16x128xf32>
    %483 = arith.mulf %482, %481 : vector<16x128xf32>
    %484 = arith.maximumf %481, %483 : vector<16x128xf32>
    %485 = vector.broadcast %43 : f32 to vector<16x128xf32>
    %486 = arith.mulf %484, %485 : vector<16x128xf32>
    %487 = arith.addf %469, %486 : vector<16x128xf32>
    %488 = vector.broadcast %44 : f32 to vector<16x128xf32>
    %489 = arith.mulf %484, %488 : vector<16x128xf32>
    %490 = arith.addf %473, %489 : vector<16x128xf32>
    %491 = vector.broadcast %45 : f32 to vector<16x128xf32>
    %492 = arith.mulf %484, %491 : vector<16x128xf32>
    %493 = arith.addf %477, %492 : vector<16x128xf32>
    %494 = vector.broadcast %2 : f32 to vector<16x128xf32>
    %495 = arith.mulf %458, %494 : vector<16x128xf32>
    %496 = vector.broadcast %22 : f32 to vector<16x128xf32>
    %497 = arith.addf %495, %496 : vector<16x128xf32>
    %cst_28 = arith.constant 0.00999999977 : f32
    %498 = vector.broadcast %cst_28 : f32 to vector<16x128xf32>
    %499 = arith.mulf %498, %497 : vector<16x128xf32>
    %500 = arith.maximumf %497, %499 : vector<16x128xf32>
    %501 = vector.broadcast %46 : f32 to vector<16x128xf32>
    %502 = arith.mulf %500, %501 : vector<16x128xf32>
    %503 = arith.addf %487, %502 : vector<16x128xf32>
    %504 = vector.broadcast %47 : f32 to vector<16x128xf32>
    %505 = arith.mulf %500, %504 : vector<16x128xf32>
    %506 = arith.addf %490, %505 : vector<16x128xf32>
    %507 = vector.broadcast %48 : f32 to vector<16x128xf32>
    %508 = arith.mulf %500, %507 : vector<16x128xf32>
    %509 = arith.addf %493, %508 : vector<16x128xf32>
    %510 = vector.broadcast %3 : f32 to vector<16x128xf32>
    %511 = arith.mulf %458, %510 : vector<16x128xf32>
    %512 = vector.broadcast %23 : f32 to vector<16x128xf32>
    %513 = arith.addf %511, %512 : vector<16x128xf32>
    %cst_29 = arith.constant 0.00999999977 : f32
    %514 = vector.broadcast %cst_29 : f32 to vector<16x128xf32>
    %515 = arith.mulf %514, %513 : vector<16x128xf32>
    %516 = arith.maximumf %513, %515 : vector<16x128xf32>
    %517 = vector.broadcast %49 : f32 to vector<16x128xf32>
    %518 = arith.mulf %516, %517 : vector<16x128xf32>
    %519 = arith.addf %503, %518 : vector<16x128xf32>
    %520 = vector.broadcast %50 : f32 to vector<16x128xf32>
    %521 = arith.mulf %516, %520 : vector<16x128xf32>
    %522 = arith.addf %506, %521 : vector<16x128xf32>
    %523 = vector.broadcast %51 : f32 to vector<16x128xf32>
    %524 = arith.mulf %516, %523 : vector<16x128xf32>
    %525 = arith.addf %509, %524 : vector<16x128xf32>
    %526 = vector.broadcast %4 : f32 to vector<16x128xf32>
    %527 = arith.mulf %458, %526 : vector<16x128xf32>
    %528 = vector.broadcast %24 : f32 to vector<16x128xf32>
    %529 = arith.addf %527, %528 : vector<16x128xf32>
    %cst_30 = arith.constant 0.00999999977 : f32
    %530 = vector.broadcast %cst_30 : f32 to vector<16x128xf32>
    %531 = arith.mulf %530, %529 : vector<16x128xf32>
    %532 = arith.maximumf %529, %531 : vector<16x128xf32>
    %533 = vector.broadcast %52 : f32 to vector<16x128xf32>
    %534 = arith.mulf %532, %533 : vector<16x128xf32>
    %535 = arith.addf %519, %534 : vector<16x128xf32>
    %536 = vector.broadcast %53 : f32 to vector<16x128xf32>
    %537 = arith.mulf %532, %536 : vector<16x128xf32>
    %538 = arith.addf %522, %537 : vector<16x128xf32>
    %539 = vector.broadcast %54 : f32 to vector<16x128xf32>
    %540 = arith.mulf %532, %539 : vector<16x128xf32>
    %541 = arith.addf %525, %540 : vector<16x128xf32>
    %542 = vector.broadcast %5 : f32 to vector<16x128xf32>
    %543 = arith.mulf %458, %542 : vector<16x128xf32>
    %544 = vector.broadcast %25 : f32 to vector<16x128xf32>
    %545 = arith.addf %543, %544 : vector<16x128xf32>
    %cst_31 = arith.constant 0.00999999977 : f32
    %546 = vector.broadcast %cst_31 : f32 to vector<16x128xf32>
    %547 = arith.mulf %546, %545 : vector<16x128xf32>
    %548 = arith.maximumf %545, %547 : vector<16x128xf32>
    %549 = vector.broadcast %55 : f32 to vector<16x128xf32>
    %550 = arith.mulf %548, %549 : vector<16x128xf32>
    %551 = arith.addf %535, %550 : vector<16x128xf32>
    %552 = vector.broadcast %56 : f32 to vector<16x128xf32>
    %553 = arith.mulf %548, %552 : vector<16x128xf32>
    %554 = arith.addf %538, %553 : vector<16x128xf32>
    %555 = vector.broadcast %57 : f32 to vector<16x128xf32>
    %556 = arith.mulf %548, %555 : vector<16x128xf32>
    %557 = arith.addf %541, %556 : vector<16x128xf32>
    %558 = vector.broadcast %6 : f32 to vector<16x128xf32>
    %559 = arith.mulf %458, %558 : vector<16x128xf32>
    %560 = vector.broadcast %26 : f32 to vector<16x128xf32>
    %561 = arith.addf %559, %560 : vector<16x128xf32>
    %cst_32 = arith.constant 0.00999999977 : f32
    %562 = vector.broadcast %cst_32 : f32 to vector<16x128xf32>
    %563 = arith.mulf %562, %561 : vector<16x128xf32>
    %564 = arith.maximumf %561, %563 : vector<16x128xf32>
    %565 = vector.broadcast %58 : f32 to vector<16x128xf32>
    %566 = arith.mulf %564, %565 : vector<16x128xf32>
    %567 = arith.addf %551, %566 : vector<16x128xf32>
    %568 = vector.broadcast %59 : f32 to vector<16x128xf32>
    %569 = arith.mulf %564, %568 : vector<16x128xf32>
    %570 = arith.addf %554, %569 : vector<16x128xf32>
    %571 = vector.broadcast %60 : f32 to vector<16x128xf32>
    %572 = arith.mulf %564, %571 : vector<16x128xf32>
    %573 = arith.addf %557, %572 : vector<16x128xf32>
    %574 = vector.broadcast %7 : f32 to vector<16x128xf32>
    %575 = arith.mulf %458, %574 : vector<16x128xf32>
    %576 = vector.broadcast %27 : f32 to vector<16x128xf32>
    %577 = arith.addf %575, %576 : vector<16x128xf32>
    %cst_33 = arith.constant 0.00999999977 : f32
    %578 = vector.broadcast %cst_33 : f32 to vector<16x128xf32>
    %579 = arith.mulf %578, %577 : vector<16x128xf32>
    %580 = arith.maximumf %577, %579 : vector<16x128xf32>
    %581 = vector.broadcast %61 : f32 to vector<16x128xf32>
    %582 = arith.mulf %580, %581 : vector<16x128xf32>
    %583 = arith.addf %567, %582 : vector<16x128xf32>
    %584 = vector.broadcast %62 : f32 to vector<16x128xf32>
    %585 = arith.mulf %580, %584 : vector<16x128xf32>
    %586 = arith.addf %570, %585 : vector<16x128xf32>
    %587 = vector.broadcast %63 : f32 to vector<16x128xf32>
    %588 = arith.mulf %580, %587 : vector<16x128xf32>
    %589 = arith.addf %573, %588 : vector<16x128xf32>
    %590 = vector.broadcast %8 : f32 to vector<16x128xf32>
    %591 = arith.mulf %458, %590 : vector<16x128xf32>
    %592 = vector.broadcast %28 : f32 to vector<16x128xf32>
    %593 = arith.addf %591, %592 : vector<16x128xf32>
    %cst_34 = arith.constant 0.00999999977 : f32
    %594 = vector.broadcast %cst_34 : f32 to vector<16x128xf32>
    %595 = arith.mulf %594, %593 : vector<16x128xf32>
    %596 = arith.maximumf %593, %595 : vector<16x128xf32>
    %597 = vector.broadcast %64 : f32 to vector<16x128xf32>
    %598 = arith.mulf %596, %597 : vector<16x128xf32>
    %599 = arith.addf %583, %598 : vector<16x128xf32>
    %600 = vector.broadcast %65 : f32 to vector<16x128xf32>
    %601 = arith.mulf %596, %600 : vector<16x128xf32>
    %602 = arith.addf %586, %601 : vector<16x128xf32>
    %603 = vector.broadcast %66 : f32 to vector<16x128xf32>
    %604 = arith.mulf %596, %603 : vector<16x128xf32>
    %605 = arith.addf %589, %604 : vector<16x128xf32>
    %606 = vector.broadcast %9 : f32 to vector<16x128xf32>
    %607 = arith.mulf %458, %606 : vector<16x128xf32>
    %608 = vector.broadcast %29 : f32 to vector<16x128xf32>
    %609 = arith.addf %607, %608 : vector<16x128xf32>
    %cst_35 = arith.constant 0.00999999977 : f32
    %610 = vector.broadcast %cst_35 : f32 to vector<16x128xf32>
    %611 = arith.mulf %610, %609 : vector<16x128xf32>
    %612 = arith.maximumf %609, %611 : vector<16x128xf32>
    %613 = vector.broadcast %67 : f32 to vector<16x128xf32>
    %614 = arith.mulf %612, %613 : vector<16x128xf32>
    %615 = arith.addf %599, %614 : vector<16x128xf32>
    %616 = vector.broadcast %68 : f32 to vector<16x128xf32>
    %617 = arith.mulf %612, %616 : vector<16x128xf32>
    %618 = arith.addf %602, %617 : vector<16x128xf32>
    %619 = vector.broadcast %69 : f32 to vector<16x128xf32>
    %620 = arith.mulf %612, %619 : vector<16x128xf32>
    %621 = arith.addf %605, %620 : vector<16x128xf32>
    %622 = vector.broadcast %10 : f32 to vector<16x128xf32>
    %623 = arith.mulf %458, %622 : vector<16x128xf32>
    %624 = vector.broadcast %30 : f32 to vector<16x128xf32>
    %625 = arith.addf %623, %624 : vector<16x128xf32>
    %cst_36 = arith.constant 0.00999999977 : f32
    %626 = vector.broadcast %cst_36 : f32 to vector<16x128xf32>
    %627 = arith.mulf %626, %625 : vector<16x128xf32>
    %628 = arith.maximumf %625, %627 : vector<16x128xf32>
    %629 = vector.broadcast %70 : f32 to vector<16x128xf32>
    %630 = arith.mulf %628, %629 : vector<16x128xf32>
    %631 = arith.addf %615, %630 : vector<16x128xf32>
    %632 = vector.broadcast %71 : f32 to vector<16x128xf32>
    %633 = arith.mulf %628, %632 : vector<16x128xf32>
    %634 = arith.addf %618, %633 : vector<16x128xf32>
    %635 = vector.broadcast %72 : f32 to vector<16x128xf32>
    %636 = arith.mulf %628, %635 : vector<16x128xf32>
    %637 = arith.addf %621, %636 : vector<16x128xf32>
    %638 = vector.broadcast %11 : f32 to vector<16x128xf32>
    %639 = arith.mulf %458, %638 : vector<16x128xf32>
    %640 = vector.broadcast %31 : f32 to vector<16x128xf32>
    %641 = arith.addf %639, %640 : vector<16x128xf32>
    %cst_37 = arith.constant 0.00999999977 : f32
    %642 = vector.broadcast %cst_37 : f32 to vector<16x128xf32>
    %643 = arith.mulf %642, %641 : vector<16x128xf32>
    %644 = arith.maximumf %641, %643 : vector<16x128xf32>
    %645 = vector.broadcast %73 : f32 to vector<16x128xf32>
    %646 = arith.mulf %644, %645 : vector<16x128xf32>
    %647 = arith.addf %631, %646 : vector<16x128xf32>
    %648 = vector.broadcast %74 : f32 to vector<16x128xf32>
    %649 = arith.mulf %644, %648 : vector<16x128xf32>
    %650 = arith.addf %634, %649 : vector<16x128xf32>
    %651 = vector.broadcast %75 : f32 to vector<16x128xf32>
    %652 = arith.mulf %644, %651 : vector<16x128xf32>
    %653 = arith.addf %637, %652 : vector<16x128xf32>
    %654 = vector.broadcast %12 : f32 to vector<16x128xf32>
    %655 = arith.mulf %458, %654 : vector<16x128xf32>
    %656 = vector.broadcast %32 : f32 to vector<16x128xf32>
    %657 = arith.addf %655, %656 : vector<16x128xf32>
    %cst_38 = arith.constant 0.00999999977 : f32
    %658 = vector.broadcast %cst_38 : f32 to vector<16x128xf32>
    %659 = arith.mulf %658, %657 : vector<16x128xf32>
    %660 = arith.maximumf %657, %659 : vector<16x128xf32>
    %661 = vector.broadcast %76 : f32 to vector<16x128xf32>
    %662 = arith.mulf %660, %661 : vector<16x128xf32>
    %663 = arith.addf %647, %662 : vector<16x128xf32>
    %664 = vector.broadcast %77 : f32 to vector<16x128xf32>
    %665 = arith.mulf %660, %664 : vector<16x128xf32>
    %666 = arith.addf %650, %665 : vector<16x128xf32>
    %667 = vector.broadcast %78 : f32 to vector<16x128xf32>
    %668 = arith.mulf %660, %667 : vector<16x128xf32>
    %669 = arith.addf %653, %668 : vector<16x128xf32>
    %670 = vector.broadcast %13 : f32 to vector<16x128xf32>
    %671 = arith.mulf %458, %670 : vector<16x128xf32>
    %672 = vector.broadcast %33 : f32 to vector<16x128xf32>
    %673 = arith.addf %671, %672 : vector<16x128xf32>
    %cst_39 = arith.constant 0.00999999977 : f32
    %674 = vector.broadcast %cst_39 : f32 to vector<16x128xf32>
    %675 = arith.mulf %674, %673 : vector<16x128xf32>
    %676 = arith.maximumf %673, %675 : vector<16x128xf32>
    %677 = vector.broadcast %79 : f32 to vector<16x128xf32>
    %678 = arith.mulf %676, %677 : vector<16x128xf32>
    %679 = arith.addf %663, %678 : vector<16x128xf32>
    %680 = vector.broadcast %80 : f32 to vector<16x128xf32>
    %681 = arith.mulf %676, %680 : vector<16x128xf32>
    %682 = arith.addf %666, %681 : vector<16x128xf32>
    %683 = vector.broadcast %81 : f32 to vector<16x128xf32>
    %684 = arith.mulf %676, %683 : vector<16x128xf32>
    %685 = arith.addf %669, %684 : vector<16x128xf32>
    %686 = vector.broadcast %14 : f32 to vector<16x128xf32>
    %687 = arith.mulf %458, %686 : vector<16x128xf32>
    %688 = vector.broadcast %34 : f32 to vector<16x128xf32>
    %689 = arith.addf %687, %688 : vector<16x128xf32>
    %cst_40 = arith.constant 0.00999999977 : f32
    %690 = vector.broadcast %cst_40 : f32 to vector<16x128xf32>
    %691 = arith.mulf %690, %689 : vector<16x128xf32>
    %692 = arith.maximumf %689, %691 : vector<16x128xf32>
    %693 = vector.broadcast %82 : f32 to vector<16x128xf32>
    %694 = arith.mulf %692, %693 : vector<16x128xf32>
    %695 = arith.addf %679, %694 : vector<16x128xf32>
    %696 = vector.broadcast %83 : f32 to vector<16x128xf32>
    %697 = arith.mulf %692, %696 : vector<16x128xf32>
    %698 = arith.addf %682, %697 : vector<16x128xf32>
    %699 = vector.broadcast %84 : f32 to vector<16x128xf32>
    %700 = arith.mulf %692, %699 : vector<16x128xf32>
    %701 = arith.addf %685, %700 : vector<16x128xf32>
    %702 = vector.broadcast %15 : f32 to vector<16x128xf32>
    %703 = arith.mulf %458, %702 : vector<16x128xf32>
    %704 = vector.broadcast %35 : f32 to vector<16x128xf32>
    %705 = arith.addf %703, %704 : vector<16x128xf32>
    %cst_41 = arith.constant 0.00999999977 : f32
    %706 = vector.broadcast %cst_41 : f32 to vector<16x128xf32>
    %707 = arith.mulf %706, %705 : vector<16x128xf32>
    %708 = arith.maximumf %705, %707 : vector<16x128xf32>
    %709 = vector.broadcast %85 : f32 to vector<16x128xf32>
    %710 = arith.mulf %708, %709 : vector<16x128xf32>
    %711 = arith.addf %695, %710 : vector<16x128xf32>
    %712 = vector.broadcast %86 : f32 to vector<16x128xf32>
    %713 = arith.mulf %708, %712 : vector<16x128xf32>
    %714 = arith.addf %698, %713 : vector<16x128xf32>
    %715 = vector.broadcast %87 : f32 to vector<16x128xf32>
    %716 = arith.mulf %708, %715 : vector<16x128xf32>
    %717 = arith.addf %701, %716 : vector<16x128xf32>
    %718 = vector.broadcast %16 : f32 to vector<16x128xf32>
    %719 = arith.mulf %458, %718 : vector<16x128xf32>
    %720 = vector.broadcast %36 : f32 to vector<16x128xf32>
    %721 = arith.addf %719, %720 : vector<16x128xf32>
    %cst_42 = arith.constant 0.00999999977 : f32
    %722 = vector.broadcast %cst_42 : f32 to vector<16x128xf32>
    %723 = arith.mulf %722, %721 : vector<16x128xf32>
    %724 = arith.maximumf %721, %723 : vector<16x128xf32>
    %725 = vector.broadcast %88 : f32 to vector<16x128xf32>
    %726 = arith.mulf %724, %725 : vector<16x128xf32>
    %727 = arith.addf %711, %726 : vector<16x128xf32>
    %728 = vector.broadcast %89 : f32 to vector<16x128xf32>
    %729 = arith.mulf %724, %728 : vector<16x128xf32>
    %730 = arith.addf %714, %729 : vector<16x128xf32>
    %731 = vector.broadcast %90 : f32 to vector<16x128xf32>
    %732 = arith.mulf %724, %731 : vector<16x128xf32>
    %733 = arith.addf %717, %732 : vector<16x128xf32>
    %734 = vector.broadcast %17 : f32 to vector<16x128xf32>
    %735 = arith.mulf %458, %734 : vector<16x128xf32>
    %736 = vector.broadcast %37 : f32 to vector<16x128xf32>
    %737 = arith.addf %735, %736 : vector<16x128xf32>
    %cst_43 = arith.constant 0.00999999977 : f32
    %738 = vector.broadcast %cst_43 : f32 to vector<16x128xf32>
    %739 = arith.mulf %738, %737 : vector<16x128xf32>
    %740 = arith.maximumf %737, %739 : vector<16x128xf32>
    %741 = vector.broadcast %91 : f32 to vector<16x128xf32>
    %742 = arith.mulf %740, %741 : vector<16x128xf32>
    %743 = arith.addf %727, %742 : vector<16x128xf32>
    %744 = vector.broadcast %92 : f32 to vector<16x128xf32>
    %745 = arith.mulf %740, %744 : vector<16x128xf32>
    %746 = arith.addf %730, %745 : vector<16x128xf32>
    %747 = vector.broadcast %93 : f32 to vector<16x128xf32>
    %748 = arith.mulf %740, %747 : vector<16x128xf32>
    %749 = arith.addf %733, %748 : vector<16x128xf32>
    %750 = vector.broadcast %18 : f32 to vector<16x128xf32>
    %751 = arith.mulf %458, %750 : vector<16x128xf32>
    %752 = vector.broadcast %38 : f32 to vector<16x128xf32>
    %753 = arith.addf %751, %752 : vector<16x128xf32>
    %cst_44 = arith.constant 0.00999999977 : f32
    %754 = vector.broadcast %cst_44 : f32 to vector<16x128xf32>
    %755 = arith.mulf %754, %753 : vector<16x128xf32>
    %756 = arith.maximumf %753, %755 : vector<16x128xf32>
    %757 = vector.broadcast %94 : f32 to vector<16x128xf32>
    %758 = arith.mulf %756, %757 : vector<16x128xf32>
    %759 = arith.addf %743, %758 : vector<16x128xf32>
    %760 = vector.broadcast %95 : f32 to vector<16x128xf32>
    %761 = arith.mulf %756, %760 : vector<16x128xf32>
    %762 = arith.addf %746, %761 : vector<16x128xf32>
    %763 = vector.broadcast %96 : f32 to vector<16x128xf32>
    %764 = arith.mulf %756, %763 : vector<16x128xf32>
    %765 = arith.addf %749, %764 : vector<16x128xf32>
    %766 = vector.broadcast %19 : f32 to vector<16x128xf32>
    %767 = arith.mulf %458, %766 : vector<16x128xf32>
    %768 = vector.broadcast %39 : f32 to vector<16x128xf32>
    %769 = arith.addf %767, %768 : vector<16x128xf32>
    %cst_45 = arith.constant 0.00999999977 : f32
    %770 = vector.broadcast %cst_45 : f32 to vector<16x128xf32>
    %771 = arith.mulf %770, %769 : vector<16x128xf32>
    %772 = arith.maximumf %769, %771 : vector<16x128xf32>
    %773 = vector.broadcast %97 : f32 to vector<16x128xf32>
    %774 = arith.mulf %772, %773 : vector<16x128xf32>
    %775 = arith.addf %759, %774 : vector<16x128xf32>
    %776 = vector.broadcast %98 : f32 to vector<16x128xf32>
    %777 = arith.mulf %772, %776 : vector<16x128xf32>
    %778 = arith.addf %762, %777 : vector<16x128xf32>
    %779 = vector.broadcast %99 : f32 to vector<16x128xf32>
    %780 = arith.mulf %772, %779 : vector<16x128xf32>
    %781 = arith.addf %765, %780 : vector<16x128xf32>
    %cst_46 = arith.constant 0.00999999977 : f32
    %782 = vector.broadcast %cst_46 : f32 to vector<16x128xf32>
    %783 = arith.mulf %782, %775 : vector<16x128xf32>
    %784 = arith.maximumf %775, %783 : vector<16x128xf32>
    %785 = vector.broadcast %103 : f32 to vector<16x128xf32>
    %786 = arith.mulf %784, %785 : vector<16x128xf32>
    %787 = vector.broadcast %106 : f32 to vector<16x128xf32>
    %788 = arith.addf %786, %787 : vector<16x128xf32>
    %cst_47 = arith.constant 0.00999999977 : f32
    %789 = vector.broadcast %cst_47 : f32 to vector<16x128xf32>
    %790 = arith.mulf %789, %778 : vector<16x128xf32>
    %791 = arith.maximumf %778, %790 : vector<16x128xf32>
    %792 = vector.broadcast %104 : f32 to vector<16x128xf32>
    %793 = arith.mulf %791, %792 : vector<16x128xf32>
    %794 = arith.addf %788, %793 : vector<16x128xf32>
    %cst_48 = arith.constant 0.00999999977 : f32
    %795 = vector.broadcast %cst_48 : f32 to vector<16x128xf32>
    %796 = arith.mulf %795, %781 : vector<16x128xf32>
    %797 = arith.maximumf %781, %796 : vector<16x128xf32>
    %798 = vector.broadcast %105 : f32 to vector<16x128xf32>
    %799 = arith.mulf %797, %798 : vector<16x128xf32>
    %800 = arith.addf %794, %799 : vector<16x128xf32>
    %801 = arith.index_cast %456 : i32 to index
    %c0_49 = arith.constant 0 : index
    %802 = vector.load %arg3[%801, %c0_49] : memref<32x128xf32, #tpu.memory_space<vmem>>, vector<16x128xf32>
    tpu.vector_store %arg3[%801, %c0_49], %800 {strides = array<i32>} : memref<32x128xf32, #tpu.memory_space<vmem>>, vector<16x128xf32>,
    %c2_i32 = arith.constant 2 : i32
    return
  }
  func.func @transform_0(%arg0: i32) -> i32 {
    %c0_i32 = arith.constant 0 : i32
    %c0_i32_0 = arith.constant 0 : i32
    return %c0_i32 : i32
  }
  func.func @transform_1(%arg0: i32) -> (i32, i32) {
    %c0_i32 = arith.constant 0 : i32
    %c0_i32_0 = arith.constant 0 : i32
    return %arg0, %c0_i32 : i32, i32
  }
  func.func @transform_2(%arg0: i32) -> (i32, i32) {
    %c0_i32 = arith.constant 0 : i32
    %c0_i32_0 = arith.constant 0 : i32
    return %arg0, %c0_i32 : i32, i32
  }
}

</mosaic_0001>

<llo_original>
// kernel: network_model_forward.1
$region0: #{network_model_forward.1}
  #allocation0 [shape = 'u32[]', space=smem, size = 0x4, offset = 0x4, fixed_abs, tag = 'smem constant byte address 0x4 - core index']
  #allocation1 [shape = 'u32[144,128]{1,0:T(1,128)}', space=vmem, size = 0x12000, scoped, tag = 'internal scratch']
  %s0 = inlined_call_operand.vmem [shape: f32[107], index: 0, kind: input, shape index: {}]
  %s1 = inlined_call_operand.vmem [shape: f32[32,128], index: 1, kind: input, shape index: {}]
  %s2 = inlined_call_operand.vmem [shape: f32[32,128], index: 2, kind: output, shape index: {}]
  %s3 = sld [smem:[#allocation0]]
  $region22: #{network_model_forward.1} parent=0
    _
  %s5 = ssub.s32 1, %s3
  %s6 = scalar_select 0, %s5, %s3
  $region1: #{network_model_forward.1} parent=0
    #allocation2 [shape = 'u8[512]{0}', space=smem, size = 0x200, scoped, tag = 'input window, operand 0, single buffered']
    #allocation3 [shape = 's32[1]{0}', space=sflag, size = 0x4, scoped, tag = 'scoped memory for network_model_forward.1']
    %7 = vsyncpa [#allocation3], 0
    // Predicated region
    $region2: #{network_model_forward.1} parent=1 // pred_check
      _
    $region3: #{network_model_forward.1} parent=1 // pred_check_branch
      %9 = sbr.rel (0) target = $region5
    $region4: #{network_model_forward.1} parent=1 // pred_region
      %s11 = ssub.s32 16, 16
      %12 = vsyncadd [#allocation3], %s11
      %s14 = sshll.u32 %s0, 4
      %s15 = int_to_ptr.vmem [resolvable:$true] %s14
      %17 = dma.vmem_to_smem %s15, 16, [#allocation2], [#allocation3]
    $region5: #{network_model_forward.1} parent=1 // pred_fallthru
      _
    // Predicated region
    $region6: #{network_model_forward.1} parent=1 // pred_check
      _
    $region7: #{network_model_forward.1} parent=1 // pred_check_branch
      %19 = sbr.rel (0) target = $region9
    $region8: #{network_model_forward.1} parent=1 // pred_region
      _
    $region9: #{network_model_forward.1} parent=1 // pred_fallthru
      _
    // Predicated region
    $region10: #{network_model_forward.1} parent=1 // pred_check
      _
    $region11: #{network_model_forward.1} parent=1 // pred_check_branch
      %21 = sbr.rel (0) target = $region13
    $region12: #{network_model_forward.1} parent=1 // pred_region
      %22 = dma.done [#allocation3], 16
    $region13: #{network_model_forward.1} parent=1 // pred_fallthru
      _
    %23 = sfence
    %s24 = sld [smem:[#allocation2]]
    %s25 = sld [smem:[#allocation2 + $0x1]]
    %s26 = sld [smem:[#allocation2 + $0x2]]
    %s27 = sld [smem:[#allocation2 + $0x3]]
    %s28 = sld [smem:[#allocation2 + $0x4]]
    %s29 = sld [smem:[#allocation2 + $0x5]]
    %s30 = sld [smem:[#allocation2 + $0x6]]
    %s31 = sld [smem:[#allocation2 + $0x7]]
    %s32 = sld [smem:[#allocation2 + $0x8]]
    %s33 = sld [smem:[#allocation2 + $0x9]]
    %s34 = sld [smem:[#allocation2 + $0xa]]
    %s35 = sld [smem:[#allocation2 + $0xb]]
    %s36 = sld [smem:[#allocation2 + $0xc]]
    %s37 = sld [smem:[#allocation2 + $0xd]]
    %s38 = sld [smem:[#allocation2 + $0xe]]
    %s39 = sld [smem:[#allocation2 + $0xf]]
    %s40 = sld [smem:[#allocation2 + $0x10]]
    %s41 = sld [smem:[#allocation2 + $0x11]]
    %s42 = sld [smem:[#allocation2 + $0x12]]
    %s43 = sld [smem:[#allocation2 + $0x13]]
    %s44 = sld [smem:[#allocation2 + $0x14]]
    %s45 = sld [smem:[#allocation2 + $0x15]]
    %s46 = sld [smem:[#allocation2 + $0x16]]
    %s47 = sld [smem:[#allocation2 + $0x17]]
    %s48 = sld [smem:[#allocation2 + $0x18]]
    %s49 = sld [smem:[#allocation2 + $0x19]]
    %s50 = sld [smem:[#allocation2 + $0x1a]]
    %s51 = sld [smem:[#allocation2 + $0x1b]]
    %s52 = sld [smem:[#allocation2 + $0x1c]]
    %s53 = sld [smem:[#allocation2 + $0x1d]]
    %s54 = sld [smem:[#allocation2 + $0x1e]]
    %s55 = sld [smem:[#allocation2 + $0x1f]]
    %s56 = sld [smem:[#allocation2 + $0x20]]
    %s57 = sld [smem:[#allocation2 + $0x21]]
    %s58 = sld [smem:[#allocation2 + $0x22]]
    %s59 = sld [smem:[#allocation2 + $0x23]]
    %s60 = sld [smem:[#allocation2 + $0x24]]
    %s61 = sld [smem:[#allocation2 + $0x25]]
    %s62 = sld [smem:[#allocation2 + $0x26]]
    %s63 = sld [smem:[#allocation2 + $0x27]]
    %s64 = sld [smem:[#allocation2 + $0x28]]
    %s65 = sld [smem:[#allocation2 + $0x29]]
    %s66 = sld [smem:[#allocation2 + $0x2a]]
    %s67 = sld [smem:[#allocation2 + $0x2b]]
    %s68 = sld [smem:[#allocation2 + $0x2c]]
    %s69 = sld [smem:[#allocation2 + $0x2d]]
    %s70 = sld [smem:[#allocation2 + $0x2e]]
    %s71 = sld [smem:[#allocation2 + $0x2f]]
    %s72 = sld [smem:[#allocation2 + $0x30]]
    %s73 = sld [smem:[#allocation2 + $0x31]]
    %s74 = sld [smem:[#allocation2 + $0x32]]
    %s75 = sld [smem:[#allocation2 + $0x33]]
    %s76 = sld [smem:[#allocation2 + $0x34]]
    %s77 = sld [smem:[#allocation2 + $0x35]]
    %s78 = sld [smem:[#allocation2 + $0x36]]
    %s79 = sld [smem:[#allocation2 + $0x37]]
    %s80 = sld [smem:[#allocation2 + $0x38]]
    %s81 = sld [smem:[#allocation2 + $0x39]]
    %s82 = sld [smem:[#allocation2 + $0x3a]]
    %s83 = sld [smem:[#allocation2 + $0x3b]]
    %s84 = sld [smem:[#allocation2 + $0x3c]]
    %s85 = sld [smem:[#allocation2 + $0x3d]]
    %s86 = sld [smem:[#allocation2 + $0x3e]]
    %s87 = sld [smem:[#allocation2 + $0x3f]]
    %s88 = sld [smem:[#allocation2 + $0x40]]
    %s89 = sld [smem:[#allocation2 + $0x41]]
    %s90 = sld [smem:[#allocation2 + $0x42]]
    %s91 = sld [smem:[#allocation2 + $0x43]]
    %s92 = sld [smem:[#allocation2 + $0x44]]
    %s93 = sld [smem:[#allocation2 + $0x45]]
    %s94 = sld [smem:[#allocation2 + $0x46]]
    %s95 = sld [smem:[#allocation2 + $0x47]]
    %s96 = sld [smem:[#allocation2 + $0x48]]
    %s97 = sld [smem:[#allocation2 + $0x49]]
    %s98 = sld [smem:[#allocation2 + $0x4a]]
    %s99 = sld [smem:[#allocation2 + $0x4b]]
    %s100 = sld [smem:[#allocation2 + $0x4c]]
    %s101 = sld [smem:[#allocation2 + $0x4d]]
    %s102 = sld [smem:[#allocation2 + $0x4e]]
    %s103 = sld [smem:[#allocation2 + $0x4f]]
    %s104 = sld [smem:[#allocation2 + $0x50]]
    %s105 = sld [smem:[#allocation2 + $0x51]]
    %s106 = sld [smem:[#allocation2 + $0x52]]
    %s107 = sld [smem:[#allocation2 + $0x53]]
    %s108 = sld [smem:[#allocation2 + $0x54]]
    %s109 = sld [smem:[#allocation2 + $0x55]]
    %s110 = sld [smem:[#allocation2 + $0x56]]
    %s111 = sld [smem:[#allocation2 + $0x57]]
    %s112 = sld [smem:[#allocation2 + $0x58]]
    %s113 = sld [smem:[#allocation2 + $0x59]]
    %s114 = sld [smem:[#allocation2 + $0x5a]]
    %s115 = sld [smem:[#allocation2 + $0x5b]]
    %s116 = sld [smem:[#allocation2 + $0x5c]]
    %s117 = sld [smem:[#allocation2 + $0x5d]]
    %s118 = sld [smem:[#allocation2 + $0x5e]]
    %s119 = sld [smem:[#allocation2 + $0x5f]]
    %s120 = sld [smem:[#allocation2 + $0x60]]
    %s121 = sld [smem:[#allocation2 + $0x61]]
    %s122 = sld [smem:[#allocation2 + $0x62]]
    %s123 = sld [smem:[#allocation2 + $0x63]]
    %s124 = sld [smem:[#allocation2 + $0x64]]
    %s125 = sld [smem:[#allocation2 + $0x65]]
    %s126 = sld [smem:[#allocation2 + $0x66]]
    %s127 = sld [smem:[#allocation2 + $0x67]]
    %s128 = sld [smem:[#allocation2 + $0x68]]
    %s129 = sld [smem:[#allocation2 + $0x69]]
    %s130 = sld [smem:[#allocation2 + $0x6a]]
    %v131 = vld [vmem:[%s1] sm:$0xff]
    %v132 = vld [vmem:[%s1 + $0x8] sm:$0xff]
    %v133 = vstv %s24
    %v134 = vmul.f32 %v131, %v133
    %v135 = vmul.f32 %v132, %v133
    %v136 = vstv %s44
    %v137 = vadd.f32 %v134, %v136
    %v138 = vadd.f32 %v135, %v136
    %v139 = vmul.f32 %v137, 0.01
    %v140 = vmul.f32 %v138, 0.01
    %v141 = vmax.f32 %v137, %v139
    %v142 = vmax.f32 %v138, %v140
    %v143 = vstv %s64
    %v144 = vmul.f32 %v141, %v143
    %v145 = vmul.f32 %v142, %v143
    %v146 = vstv %s124
    %v147 = vadd.f32 %v144, %v146
    %v148 = vadd.f32 %v145, %v146
    %v149 = vstv %s65
    %v150 = vmul.f32 %v141, %v149
    %v151 = vmul.f32 %v142, %v149
    %v152 = vstv %s125
    %v153 = vadd.f32 %v150, %v152
    %v154 = vadd.f32 %v151, %v152
    %v155 = vstv %s66
    %v156 = vmul.f32 %v141, %v155
    %v157 = vmul.f32 %v142, %v155
    %v158 = vstv %s126
    %v159 = vadd.f32 %v156, %v158
    %v160 = vadd.f32 %v157, %v158
    %v161 = vstv %s25
    %v162 = vmul.f32 %v131, %v161
    %v163 = vmul.f32 %v132, %v161
    %v164 = vstv %s45
    %v165 = vadd.f32 %v162, %v164
    %v166 = vadd.f32 %v163, %v164
    %v167 = vmul.f32 %v165, 0.01
    %v168 = vmul.f32 %v166, 0.01
    %v169 = vmax.f32 %v165, %v167
    %v170 = vmax.f32 %v166, %v168
    %v171 = vstv %s67
    %v172 = vmul.f32 %v169, %v171
    %v173 = vmul.f32 %v170, %v171
    %v174 = vadd.f32 %v147, %v172
    %v175 = vadd.f32 %v148, %v173
    %v176 = vstv %s68
    %v177 = vmul.f32 %v169, %v176
    %v178 = vmul.f32 %v170, %v176
    %v179 = vadd.f32 %v153, %v177
    %v180 = vadd.f32 %v154, %v178
    %v181 = vstv %s69
    %v182 = vmul.f32 %v169, %v181
    %v183 = vmul.f32 %v170, %v181
    %v184 = vadd.f32 %v159, %v182
    %v185 = vadd.f32 %v160, %v183
    %v186 = vstv %s26
    %v187 = vmul.f32 %v131, %v186
    %v188 = vmul.f32 %v132, %v186
    %v189 = vstv %s46
    %v190 = vadd.f32 %v187, %v189
    %v191 = vadd.f32 %v188, %v189
    %v192 = vmul.f32 %v190, 0.01
    %v193 = vmul.f32 %v191, 0.01
    %v194 = vmax.f32 %v190, %v192
    %v195 = vmax.f32 %v191, %v193
    %v196 = vstv %s70
    %v197 = vmul.f32 %v194, %v196
    %v198 = vmul.f32 %v195, %v196
    %v199 = vadd.f32 %v174, %v197
    %v200 = vadd.f32 %v175, %v198
    %v201 = vstv %s71
    %v202 = vmul.f32 %v194, %v201
    %v203 = vmul.f32 %v195, %v201
    %v204 = vadd.f32 %v179, %v202
    %v205 = vadd.f32 %v180, %v203
    %v206 = vstv %s72
    %v207 = vmul.f32 %v194, %v206
    %v208 = vmul.f32 %v195, %v206
    %v209 = vadd.f32 %v184, %v207
    %v210 = vadd.f32 %v185, %v208
    %v211 = vstv %s27
    %v212 = vmul.f32 %v131, %v211
    %v213 = vmul.f32 %v132, %v211
    %v214 = vstv %s47
    %v215 = vadd.f32 %v212, %v214
    %v216 = vadd.f32 %v213, %v214
    %v217 = vmul.f32 %v215, 0.01
    %v218 = vmul.f32 %v216, 0.01
    %v219 = vmax.f32 %v215, %v217
    %v220 = vmax.f32 %v216, %v218
    %v221 = vstv %s73
    %v222 = vmul.f32 %v219, %v221
    %v223 = vmul.f32 %v220, %v221
    %v224 = vadd.f32 %v199, %v222
    %v225 = vadd.f32 %v200, %v223
    %v226 = vstv %s74
    %v227 = vmul.f32 %v219, %v226
    %v228 = vmul.f32 %v220, %v226
    %v229 = vadd.f32 %v204, %v227
    %v230 = vadd.f32 %v205, %v228
    %v231 = vstv %s75
    %v232 = vmul.f32 %v219, %v231
    %v233 = vmul.f32 %v220, %v231
    %v234 = vadd.f32 %v209, %v232
    %v235 = vadd.f32 %v210, %v233
    %v236 = vstv %s28
    %v237 = vmul.f32 %v131, %v236
    %v238 = vmul.f32 %v132, %v236
    %v239 = vstv %s48
    %v240 = vadd.f32 %v237, %v239
    %v241 = vadd.f32 %v238, %v239
    %v242 = vmul.f32 %v240, 0.01
    %v243 = vmul.f32 %v241, 0.01
    %v244 = vmax.f32 %v240, %v242
    %v245 = vmax.f32 %v241, %v243
    %v246 = vstv %s76
    %v247 = vmul.f32 %v244, %v246
    %v248 = vmul.f32 %v245, %v246
    %v249 = vadd.f32 %v224, %v247
    %v250 = vadd.f32 %v225, %v248
    %v251 = vstv %s77
    %v252 = vmul.f32 %v244, %v251
    %v253 = vmul.f32 %v245, %v251
    %v254 = vadd.f32 %v229, %v252
    %v255 = vadd.f32 %v230, %v253
    %v256 = vstv %s78
    %v257 = vmul.f32 %v244, %v256
    %v258 = vmul.f32 %v245, %v256
    %v259 = vadd.f32 %v234, %v257
    %v260 = vadd.f32 %v235, %v258
    %v261 = vstv %s29
    %v262 = vmul.f32 %v131, %v261
    %v263 = vmul.f32 %v132, %v261
    %v264 = vstv %s49
    %v265 = vadd.f32 %v262, %v264
    %v266 = vadd.f32 %v263, %v264
    %v267 = vmul.f32 %v265, 0.01
    %v268 = vmul.f32 %v266, 0.01
    %v269 = vmax.f32 %v265, %v267
    %v270 = vmax.f32 %v266, %v268
    %v271 = vstv %s79
    %v272 = vmul.f32 %v269, %v271
    %v273 = vmul.f32 %v270, %v271
    %v274 = vadd.f32 %v249, %v272
    %v275 = vadd.f32 %v250, %v273
    %v276 = vstv %s80
    %v277 = vmul.f32 %v269, %v276
    %v278 = vmul.f32 %v270, %v276
    %v279 = vadd.f32 %v254, %v277
    %v280 = vadd.f32 %v255, %v278
    %v281 = vstv %s81
    %v282 = vmul.f32 %v269, %v281
    %v283 = vmul.f32 %v270, %v281
    %v284 = vadd.f32 %v259, %v282
    %v285 = vadd.f32 %v260, %v283
    %v286 = vstv %s30
    %v287 = vmul.f32 %v131, %v286
    %v288 = vmul.f32 %v132, %v286
    %v289 = vstv %s50
    %v290 = vadd.f32 %v287, %v289
    %v291 = vadd.f32 %v288, %v289
    %v292 = vmul.f32 %v290, 0.01
    %v293 = vmul.f32 %v291, 0.01
    %v294 = vmax.f32 %v290, %v292
    %v295 = vmax.f32 %v291, %v293
    %v296 = vstv %s82
    %v297 = vmul.f32 %v294, %v296
    %v298 = vmul.f32 %v295, %v296
    %v299 = vadd.f32 %v274, %v297
    %v300 = vadd.f32 %v275, %v298
    %v301 = vstv %s83
    %v302 = vmul.f32 %v294, %v301
    %v303 = vmul.f32 %v295, %v301
    %v304 = vadd.f32 %v279, %v302
    %v305 = vadd.f32 %v280, %v303
    %v306 = vstv %s84
    %v307 = vmul.f32 %v294, %v306
    %v308 = vmul.f32 %v295, %v306
    %v309 = vadd.f32 %v284, %v307
    %v310 = vadd.f32 %v285, %v308
    %v311 = vstv %s31
    %v312 = vmul.f32 %v131, %v311
    %v313 = vmul.f32 %v132, %v311
    %v314 = vstv %s51
    %v315 = vadd.f32 %v312, %v314
    %v316 = vadd.f32 %v313, %v314
    %v317 = vmul.f32 %v315, 0.01
    %v318 = vmul.f32 %v316, 0.01
    %v319 = vmax.f32 %v315, %v317
    %v320 = vmax.f32 %v316, %v318
    %v321 = vstv %s85
    %v322 = vmul.f32 %v319, %v321
    %v323 = vmul.f32 %v320, %v321
    %v324 = vadd.f32 %v299, %v322
    %v325 = vadd.f32 %v300, %v323
    %v326 = vstv %s86
    %v327 = vmul.f32 %v319, %v326
    %v328 = vmul.f32 %v320, %v326
    %v329 = vadd.f32 %v304, %v327
    %v330 = vadd.f32 %v305, %v328
    %v331 = vstv %s87
    %v332 = vmul.f32 %v319, %v331
    %v333 = vmul.f32 %v320, %v331
    %v334 = vadd.f32 %v309, %v332
    %v335 = vadd.f32 %v310, %v333
    %v336 = vstv %s32
    %v337 = vmul.f32 %v131, %v336
    %v338 = vmul.f32 %v132, %v336
    %v339 = vstv %s52
    %v340 = vadd.f32 %v337, %v339
    %v341 = vadd.f32 %v338, %v339
    %v342 = vmul.f32 %v340, 0.01
    %v343 = vmul.f32 %v341, 0.01
    %v344 = vmax.f32 %v340, %v342
    %v345 = vmax.f32 %v341, %v343
    %v346 = vstv %s88
    %v347 = vmul.f32 %v344, %v346
    %v348 = vmul.f32 %v345, %v346
    %v349 = vadd.f32 %v324, %v347
    %v350 = vadd.f32 %v325, %v348
    %v351 = vstv %s89
    %v352 = vmul.f32 %v344, %v351
    %v353 = vmul.f32 %v345, %v351
    %v354 = vadd.f32 %v329, %v352
    %v355 = vadd.f32 %v330, %v353
    %v356 = vstv %s90
    %v357 = vmul.f32 %v344, %v356
    %v358 = vmul.f32 %v345, %v356
    %v359 = vadd.f32 %v334, %v357
    %v360 = vadd.f32 %v335, %v358
    %v361 = vstv %s33
    %v362 = vmul.f32 %v131, %v361
    %v363 = vmul.f32 %v132, %v361
    %v364 = vstv %s53
    %v365 = vadd.f32 %v362, %v364
    %v366 = vadd.f32 %v363, %v364
    %v367 = vmul.f32 %v365, 0.01
    %v368 = vmul.f32 %v366, 0.01
    %v369 = vmax.f32 %v365, %v367
    %v370 = vmax.f32 %v366, %v368
    %v371 = vstv %s91
    %v372 = vmul.f32 %v369, %v371
    %v373 = vmul.f32 %v370, %v371
    %v374 = vadd.f32 %v349, %v372
    %v375 = vadd.f32 %v350, %v373
    %v376 = vstv %s92
    %v377 = vmul.f32 %v369, %v376
    %v378 = vmul.f32 %v370, %v376
    %v379 = vadd.f32 %v354, %v377
    %v380 = vadd.f32 %v355, %v378
    %v381 = vstv %s93
    %v382 = vmul.f32 %v369, %v381
    %v383 = vmul.f32 %v370, %v381
    %v384 = vadd.f32 %v359, %v382
    %v385 = vadd.f32 %v360, %v383
    %v386 = vstv %s34
    %v387 = vmul.f32 %v131, %v386
    %v388 = vmul.f32 %v132, %v386
    %v389 = vstv %s54
    %v390 = vadd.f32 %v387, %v389
    %v391 = vadd.f32 %v388, %v389
    %v392 = vmul.f32 %v390, 0.01
    %v393 = vmul.f32 %v391, 0.01
    %v394 = vmax.f32 %v390, %v392
    %v395 = vmax.f32 %v391, %v393
    %v396 = vstv %s94
    %v397 = vmul.f32 %v394, %v396
    %v398 = vmul.f32 %v395, %v396
    %v399 = vadd.f32 %v374, %v397
    %v400 = vadd.f32 %v375, %v398
    %v401 = vstv %s95
    %v402 = vmul.f32 %v394, %v401
    %v403 = vmul.f32 %v395, %v401
    %v404 = vadd.f32 %v379, %v402
    %v405 = vadd.f32 %v380, %v403
    %v406 = vstv %s96
    %v407 = vmul.f32 %v394, %v406
    %v408 = vmul.f32 %v395, %v406
    %v409 = vadd.f32 %v384, %v407
    %v410 = vadd.f32 %v385, %v408
    %v411 = vstv %s35
    %v412 = vmul.f32 %v131, %v411
    %v413 = vmul.f32 %v132, %v411
    %v414 = vstv %s55
    %v415 = vadd.f32 %v412, %v414
    %v416 = vadd.f32 %v413, %v414
    %v417 = vmul.f32 %v415, 0.01
    %v418 = vmul.f32 %v416, 0.01
    %v419 = vmax.f32 %v415, %v417
    %v420 = vmax.f32 %v416, %v418
    %v421 = vstv %s97
    %v422 = vmul.f32 %v419, %v421
    %v423 = vmul.f32 %v420, %v421
    %v424 = vadd.f32 %v399, %v422
    %v425 = vadd.f32 %v400, %v423
    %v426 = vstv %s98
    %v427 = vmul.f32 %v419, %v426
    %v428 = vmul.f32 %v420, %v426
    %v429 = vadd.f32 %v404, %v427
    %v430 = vadd.f32 %v405, %v428
    %v431 = vstv %s99
    %v432 = vmul.f32 %v419, %v431
    %v433 = vmul.f32 %v420, %v431
    %v434 = vadd.f32 %v409, %v432
    %v435 = vadd.f32 %v410, %v433
    %v436 = vstv %s36
    %v437 = vmul.f32 %v131, %v436
    %v438 = vmul.f32 %v132, %v436
    %v439 = vstv %s56
    %v440 = vadd.f32 %v437, %v439
    %v441 = vadd.f32 %v438, %v439
    %v442 = vmul.f32 %v440, 0.01
    %v443 = vmul.f32 %v441, 0.01
    %v444 = vmax.f32 %v440, %v442
    %v445 = vmax.f32 %v441, %v443
    %v446 = vstv %s100
    %v447 = vmul.f32 %v444, %v446
    %v448 = vmul.f32 %v445, %v446
    %v449 = vadd.f32 %v424, %v447
    %v450 = vadd.f32 %v425, %v448
    %v451 = vstv %s101
    %v452 = vmul.f32 %v444, %v451
    %v453 = vmul.f32 %v445, %v451
    %v454 = vadd.f32 %v429, %v452
    %v455 = vadd.f32 %v430, %v453
    %v456 = vstv %s102
    %v457 = vmul.f32 %v444, %v456
    %v458 = vmul.f32 %v445, %v456
    %v459 = vadd.f32 %v434, %v457
    %v460 = vadd.f32 %v435, %v458
    %v461 = vstv %s37
    %v462 = vmul.f32 %v131, %v461
    %v463 = vmul.f32 %v132, %v461
    %v464 = vstv %s57
    %v465 = vadd.f32 %v462, %v464
    %v466 = vadd.f32 %v463, %v464
    %v467 = vmul.f32 %v465, 0.01
    %v468 = vmul.f32 %v466, 0.01
    %v469 = vmax.f32 %v465, %v467
    %v470 = vmax.f32 %v466, %v468
    %v471 = vstv %s103
    %v472 = vmul.f32 %v469, %v471
    %v473 = vmul.f32 %v470, %v471
    %v474 = vadd.f32 %v449, %v472
    %v475 = vadd.f32 %v450, %v473
    %v476 = vstv %s104
    %v477 = vmul.f32 %v469, %v476
    %v478 = vmul.f32 %v470, %v476
    %v479 = vadd.f32 %v454, %v477
    %v480 = vadd.f32 %v455, %v478
    %v481 = vstv %s105
    %v482 = vmul.f32 %v469, %v481
    %v483 = vmul.f32 %v470, %v481
    %v484 = vadd.f32 %v459, %v482
    %v485 = vadd.f32 %v460, %v483
    %v486 = vstv %s38
    %v487 = vmul.f32 %v131, %v486
    %v488 = vmul.f32 %v132, %v486
    %v489 = vstv %s58
    %v490 = vadd.f32 %v487, %v489
    %v491 = vadd.f32 %v488, %v489
    %v492 = vmul.f32 %v490, 0.01
    %v493 = vmul.f32 %v491, 0.01
    %v494 = vmax.f32 %v490, %v492
    %v495 = vmax.f32 %v491, %v493
    %v496 = vstv %s106
    %v497 = vmul.f32 %v494, %v496
    %v498 = vmul.f32 %v495, %v496
    %v499 = vadd.f32 %v474, %v497
    %v500 = vadd.f32 %v475, %v498
    %v501 = vstv %s107
    %v502 = vmul.f32 %v494, %v501
    %v503 = vmul.f32 %v495, %v501
    %v504 = vadd.f32 %v479, %v502
    %v505 = vadd.f32 %v480, %v503
    %v506 = vstv %s108
    %v507 = vmul.f32 %v494, %v506
    %v508 = vmul.f32 %v495, %v506
    %v509 = vadd.f32 %v484, %v507
    %v510 = vadd.f32 %v485, %v508
    %v511 = vstv %s39
    %v512 = vmul.f32 %v131, %v511
    %v513 = vmul.f32 %v132, %v511
    %v514 = vstv %s59
    %v515 = vadd.f32 %v512, %v514
    %v516 = vadd.f32 %v513, %v514
    %v517 = vmul.f32 %v515, 0.01
    %v518 = vmul.f32 %v516, 0.01
    %v519 = vmax.f32 %v515, %v517
    %v520 = vmax.f32 %v516, %v518
    %v521 = vstv %s109
    %v522 = vmul.f32 %v519, %v521
    %v523 = vmul.f32 %v520, %v521
    %v524 = vadd.f32 %v499, %v522
    %v525 = vadd.f32 %v500, %v523
    %v526 = vstv %s110
    %v527 = vmul.f32 %v519, %v526
    %v528 = vmul.f32 %v520, %v526
    %v529 = vadd.f32 %v504, %v527
    %v530 = vadd.f32 %v505, %v528
    %v531 = vstv %s111
    %v532 = vmul.f32 %v519, %v531
    %v533 = vmul.f32 %v520, %v531
    %v534 = vadd.f32 %v509, %v532
    %v535 = vadd.f32 %v510, %v533
    %v536 = vstv %s40
    %v537 = vmul.f32 %v131, %v536
    %v538 = vmul.f32 %v132, %v536
    %v539 = vstv %s60
    %v540 = vadd.f32 %v537, %v539
    %v541 = vadd.f32 %v538, %v539
    %v542 = vmul.f32 %v540, 0.01
    %v543 = vmul.f32 %v541, 0.01
    %v544 = vmax.f32 %v540, %v542
    %v545 = vmax.f32 %v541, %v543
    %v546 = vstv %s112
    %v547 = vmul.f32 %v544, %v546
    %v548 = vmul.f32 %v545, %v546
    %v549 = vadd.f32 %v524, %v547
    %v550 = vadd.f32 %v525, %v548
    %v551 = vstv %s113
    %v552 = vmul.f32 %v544, %v551
    %v553 = vmul.f32 %v545, %v551
    %v554 = vadd.f32 %v529, %v552
    %v555 = vadd.f32 %v530, %v553
    %v556 = vstv %s114
    %v557 = vmul.f32 %v544, %v556
    %v558 = vmul.f32 %v545, %v556
    %v559 = vadd.f32 %v534, %v557
    %v560 = vadd.f32 %v535, %v558
    %v561 = vstv %s41
    %v562 = vmul.f32 %v131, %v561
    %v563 = vmul.f32 %v132, %v561
    %v564 = vstv %s61
    %v565 = vadd.f32 %v562, %v564
    %v566 = vadd.f32 %v563, %v564
    %v567 = vmul.f32 %v565, 0.01
    %v568 = vmul.f32 %v566, 0.01
    %v569 = vmax.f32 %v565, %v567
    %v570 = vmax.f32 %v566, %v568
    %v571 = vstv %s115
    %v572 = vmul.f32 %v569, %v571
    %v573 = vmul.f32 %v570, %v571
    %v574 = vadd.f32 %v549, %v572
    %v575 = vadd.f32 %v550, %v573
    %v576 = vstv %s116
    %v577 = vmul.f32 %v569, %v576
    %v578 = vmul.f32 %v570, %v576
    %v579 = vadd.f32 %v554, %v577
    %v580 = vadd.f32 %v555, %v578
    %v581 = vstv %s117
    %v582 = vmul.f32 %v569, %v581
    %v583 = vmul.f32 %v570, %v581
    %v584 = vadd.f32 %v559, %v582
    %v585 = vadd.f32 %v560, %v583
    %v586 = vstv %s42
    %v587 = vmul.f32 %v131, %v586
    %v588 = vmul.f32 %v132, %v586
    %v589 = vstv %s62
    %v590 = vadd.f32 %v587, %v589
    %v591 = vadd.f32 %v588, %v589
    %v592 = vmul.f32 %v590, 0.01
    %v593 = vmul.f32 %v591, 0.01
    %v594 = vmax.f32 %v590, %v592
    %v595 = vmax.f32 %v591, %v593
    %v596 = vstv %s118
    %v597 = vmul.f32 %v594, %v596
    %v598 = vmul.f32 %v595, %v596
    %v599 = vadd.f32 %v574, %v597
    %v600 = vadd.f32 %v575, %v598
    %v601 = vstv %s119
    %v602 = vmul.f32 %v594, %v601
    %v603 = vmul.f32 %v595, %v601
    %v604 = vadd.f32 %v579, %v602
    %v605 = vadd.f32 %v580, %v603
    %v606 = vstv %s120
    %v607 = vmul.f32 %v594, %v606
    %v608 = vmul.f32 %v595, %v606
    %v609 = vadd.f32 %v584, %v607
    %v610 = vadd.f32 %v585, %v608
    %v611 = vstv %s43
    %v612 = vmul.f32 %v131, %v611
    %v613 = vmul.f32 %v132, %v611
    %v614 = vstv %s63
    %v615 = vadd.f32 %v612, %v614
    %v616 = vadd.f32 %v613, %v614
    %v617 = vmul.f32 %v615, 0.01
    %v618 = vmul.f32 %v616, 0.01
    %v619 = vmax.f32 %v615, %v617
    %v620 = vmax.f32 %v616, %v618
    %v621 = vstv %s121
    %v622 = vmul.f32 %v619, %v621
    %v623 = vmul.f32 %v620, %v621
    %v624 = vadd.f32 %v599, %v622
    %v625 = vadd.f32 %v600, %v623
    %v626 = vstv %s122
    %v627 = vmul.f32 %v619, %v626
    %v628 = vmul.f32 %v620, %v626
    %v629 = vadd.f32 %v604, %v627
    %v630 = vadd.f32 %v605, %v628
    %v631 = vstv %s123
    %v632 = vmul.f32 %v619, %v631
    %v633 = vmul.f32 %v620, %v631
    %v634 = vadd.f32 %v609, %v632
    %v635 = vadd.f32 %v610, %v633
    %v636 = vmul.f32 %v624, 0.01
    %v637 = vmul.f32 %v625, 0.01
    %v638 = vmax.f32 %v624, %v636
    %v639 = vmax.f32 %v625, %v637
    %v640 = vstv %s127
    %v641 = vmul.f32 %v638, %v640
    %v642 = vmul.f32 %v639, %v640
    %v643 = vstv %s130
    %v644 = vadd.f32 %v641, %v643
    %v645 = vadd.f32 %v642, %v643
    %v646 = vmul.f32 %v629, 0.01
    %v647 = vmul.f32 %v630, 0.01
    %v648 = vmax.f32 %v629, %v646
    %v649 = vmax.f32 %v630, %v647
    %v650 = vstv %s128
    %v651 = vmul.f32 %v648, %v650
    %v652 = vmul.f32 %v649, %v650
    %v653 = vadd.f32 %v644, %v651
    %v654 = vadd.f32 %v645, %v652
    %v655 = vmul.f32 %v634, 0.01
    %v656 = vmul.f32 %v635, 0.01
    %v657 = vmax.f32 %v634, %v655
    %v658 = vmax.f32 %v635, %v656
    %v659 = vstv %s129
    %v660 = vmul.f32 %v657, %v659
    %v661 = vmul.f32 %v658, %v659
    %v662 = vadd.f32 %v653, %v660
    %v663 = vadd.f32 %v654, %v661
    %664 = vst [vmem:[%s2] sm:$0xff] %v662
    %665 = vst [vmem:[%s2 + $0x8] sm:$0xff] %v663
    %s666 = scalar_lea.vmem %s1, 16
    %v667 = vld [vmem:[%s666] sm:$0xff]
    %v668 = vld [vmem:[%s666 + $0x8] sm:$0xff]
    %v669 = vmul.f32 %v667, %v133
    %v670 = vmul.f32 %v668, %v133
    %v671 = vadd.f32 %v669, %v136
    %v672 = vadd.f32 %v670, %v136
    %v673 = vmul.f32 %v671, 0.01
    %v674 = vmul.f32 %v672, 0.01
    %v675 = vmax.f32 %v671, %v673
    %v676 = vmax.f32 %v672, %v674
    %v677 = vmul.f32 %v675, %v143
    %v678 = vmul.f32 %v676, %v143
    %v679 = vadd.f32 %v677, %v146
    %v680 = vadd.f32 %v678, %v146
    %v681 = vmul.f32 %v675, %v149
    %v682 = vmul.f32 %v676, %v149
    %v683 = vadd.f32 %v681, %v152
    %v684 = vadd.f32 %v682, %v152
    %v685 = vmul.f32 %v675, %v155
    %v686 = vmul.f32 %v676, %v155
    %v687 = vadd.f32 %v685, %v158
    %v688 = vadd.f32 %v686, %v158
    %v689 = vmul.f32 %v667, %v161
    %v690 = vmul.f32 %v668, %v161
    %v691 = vadd.f32 %v689, %v164
    %v692 = vadd.f32 %v690, %v164
    %v693 = vmul.f32 %v691, 0.01
    %v694 = vmul.f32 %v692, 0.01
    %v695 = vmax.f32 %v691, %v693
    %v696 = vmax.f32 %v692, %v694
    %v697 = vmul.f32 %v695, %v171
    %v698 = vmul.f32 %v696, %v171
    %v699 = vadd.f32 %v679, %v697
    %v700 = vadd.f32 %v680, %v698
    %v701 = vmul.f32 %v695, %v176
    %v702 = vmul.f32 %v696, %v176
    %v703 = vadd.f32 %v683, %v701
    %v704 = vadd.f32 %v684, %v702
    %v705 = vmul.f32 %v695, %v181
    %v706 = vmul.f32 %v696, %v181
    %v707 = vadd.f32 %v687, %v705
    %v708 = vadd.f32 %v688, %v706
    %v709 = vmul.f32 %v667, %v186
    %v710 = vmul.f32 %v668, %v186
    %v711 = vadd.f32 %v709, %v189
    %v712 = vadd.f32 %v710, %v189
    %v713 = vmul.f32 %v711, 0.01
    %v714 = vmul.f32 %v712, 0.01
    %v715 = vmax.f32 %v711, %v713
    %v716 = vmax.f32 %v712, %v714
    %v717 = vmul.f32 %v715, %v196
    %v718 = vmul.f32 %v716, %v196
    %v719 = vadd.f32 %v699, %v717
    %v720 = vadd.f32 %v700, %v718
    %v721 = vmul.f32 %v715, %v201
    %v722 = vmul.f32 %v716, %v201
    %v723 = vadd.f32 %v703, %v721
    %v724 = vadd.f32 %v704, %v722
    %v725 = vmul.f32 %v715, %v206
    %v726 = vmul.f32 %v716, %v206
    %v727 = vadd.f32 %v707, %v725
    %v728 = vadd.f32 %v708, %v726
    %v729 = vmul.f32 %v667, %v211
    %v730 = vmul.f32 %v668, %v211
    %v731 = vadd.f32 %v729, %v214
    %v732 = vadd.f32 %v730, %v214
    %v733 = vmul.f32 %v731, 0.01
    %v734 = vmul.f32 %v732, 0.01
    %v735 = vmax.f32 %v731, %v733
    %v736 = vmax.f32 %v732, %v734
    %v737 = vmul.f32 %v735, %v221
    %v738 = vmul.f32 %v736, %v221
    %v739 = vadd.f32 %v719, %v737
    %v740 = vadd.f32 %v720, %v738
    %v741 = vmul.f32 %v735, %v226
    %v742 = vmul.f32 %v736, %v226
    %v743 = vadd.f32 %v723, %v741
    %v744 = vadd.f32 %v724, %v742
    %v745 = vmul.f32 %v735, %v231
    %v746 = vmul.f32 %v736, %v231
    %v747 = vadd.f32 %v727, %v745
    %v748 = vadd.f32 %v728, %v746
    %v749 = vmul.f32 %v667, %v236
    %v750 = vmul.f32 %v668, %v236
    %v751 = vadd.f32 %v749, %v239
    %v752 = vadd.f32 %v750, %v239
    %v753 = vmul.f32 %v751, 0.01
    %v754 = vmul.f32 %v752, 0.01
    %v755 = vmax.f32 %v751, %v753
    %v756 = vmax.f32 %v752, %v754
    %v757 = vmul.f32 %v755, %v246
    %v758 = vmul.f32 %v756, %v246
    %v759 = vadd.f32 %v739, %v757
    %v760 = vadd.f32 %v740, %v758
    %v761 = vmul.f32 %v755, %v251
    %v762 = vmul.f32 %v756, %v251
    %v763 = vadd.f32 %v743, %v761
    %v764 = vadd.f32 %v744, %v762
    %v765 = vmul.f32 %v755, %v256
    %v766 = vmul.f32 %v756, %v256
    %v767 = vadd.f32 %v747, %v765
    %v768 = vadd.f32 %v748, %v766
    %v769 = vmul.f32 %v667, %v261
    %v770 = vmul.f32 %v668, %v261
    %v771 = vadd.f32 %v769, %v264
    %v772 = vadd.f32 %v770, %v264
    %v773 = vmul.f32 %v771, 0.01
    %v774 = vmul.f32 %v772, 0.01
    %v775 = vmax.f32 %v771, %v773
    %v776 = vmax.f32 %v772, %v774
    %v777 = vmul.f32 %v775, %v271
    %v778 = vmul.f32 %v776, %v271
    %v779 = vadd.f32 %v759, %v777
    %v780 = vadd.f32 %v760, %v778
    %v781 = vmul.f32 %v775, %v276
    %v782 = vmul.f32 %v776, %v276
    %v783 = vadd.f32 %v763, %v781
    %v784 = vadd.f32 %v764, %v782
    %v785 = vmul.f32 %v775, %v281
    %v786 = vmul.f32 %v776, %v281
    %v787 = vadd.f32 %v767, %v785
    %v788 = vadd.f32 %v768, %v786
    %v789 = vmul.f32 %v667, %v286
    %v790 = vmul.f32 %v668, %v286
    %v791 = vadd.f32 %v789, %v289
    %v792 = vadd.f32 %v790, %v289
    %v793 = vmul.f32 %v791, 0.01
    %v794 = vmul.f32 %v792, 0.01
    %v795 = vmax.f32 %v791, %v793
    %v796 = vmax.f32 %v792, %v794
    %v797 = vmul.f32 %v795, %v296
    %v798 = vmul.f32 %v796, %v296
    %v799 = vadd.f32 %v779, %v797
    %v800 = vadd.f32 %v780, %v798
    %v801 = vmul.f32 %v795, %v301
    %v802 = vmul.f32 %v796, %v301
    %v803 = vadd.f32 %v783, %v801
    %v804 = vadd.f32 %v784, %v802
    %v805 = vmul.f32 %v795, %v306
    %v806 = vmul.f32 %v796, %v306
    %v807 = vadd.f32 %v787, %v805
    %v808 = vadd.f32 %v788, %v806
    %v809 = vmul.f32 %v667, %v311
    %v810 = vmul.f32 %v668, %v311
    %v811 = vadd.f32 %v809, %v314
    %v812 = vadd.f32 %v810, %v314
    %v813 = vmul.f32 %v811, 0.01
    %v814 = vmul.f32 %v812, 0.01
    %v815 = vmax.f32 %v811, %v813
    %v816 = vmax.f32 %v812, %v814
    %v817 = vmul.f32 %v815, %v321
    %v818 = vmul.f32 %v816, %v321
    %v819 = vadd.f32 %v799, %v817
    %v820 = vadd.f32 %v800, %v818
    %v821 = vmul.f32 %v815, %v326
    %v822 = vmul.f32 %v816, %v326
    %v823 = vadd.f32 %v803, %v821
    %v824 = vadd.f32 %v804, %v822
    %v825 = vmul.f32 %v815, %v331
    %v826 = vmul.f32 %v816, %v331
    %v827 = vadd.f32 %v807, %v825
    %v828 = vadd.f32 %v808, %v826
    %v829 = vmul.f32 %v667, %v336
    %v830 = vmul.f32 %v668, %v336
    %v831 = vadd.f32 %v829, %v339
    %v832 = vadd.f32 %v830, %v339
    %v833 = vmul.f32 %v831, 0.01
    %v834 = vmul.f32 %v832, 0.01
    %v835 = vmax.f32 %v831, %v833
    %v836 = vmax.f32 %v832, %v834
    %v837 = vmul.f32 %v835, %v346
    %v838 = vmul.f32 %v836, %v346
    %v839 = vadd.f32 %v819, %v837
    %v840 = vadd.f32 %v820, %v838
    %v841 = vmul.f32 %v835, %v351
    %v842 = vmul.f32 %v836, %v351
    %v843 = vadd.f32 %v823, %v841
    %v844 = vadd.f32 %v824, %v842
    %v845 = vmul.f32 %v835, %v356
    %v846 = vmul.f32 %v836, %v356
    %v847 = vadd.f32 %v827, %v845
    %v848 = vadd.f32 %v828, %v846
    %v849 = vmul.f32 %v667, %v361
    %v850 = vmul.f32 %v668, %v361
    %v851 = vadd.f32 %v849, %v364
    %v852 = vadd.f32 %v850, %v364
    %v853 = vmul.f32 %v851, 0.01
    %v854 = vmul.f32 %v852, 0.01
    %v855 = vmax.f32 %v851, %v853
    %v856 = vmax.f32 %v852, %v854
    %v857 = vmul.f32 %v855, %v371
    %v858 = vmul.f32 %v856, %v371
    %v859 = vadd.f32 %v839, %v857
    %v860 = vadd.f32 %v840, %v858
    %v861 = vmul.f32 %v855, %v376
    %v862 = vmul.f32 %v856, %v376
    %v863 = vadd.f32 %v843, %v861
    %v864 = vadd.f32 %v844, %v862
    %v865 = vmul.f32 %v855, %v381
    %v866 = vmul.f32 %v856, %v381
    %v867 = vadd.f32 %v847, %v865
    %v868 = vadd.f32 %v848, %v866
    %v869 = vmul.f32 %v667, %v386
    %v870 = vmul.f32 %v668, %v386
    %v871 = vadd.f32 %v869, %v389
    %v872 = vadd.f32 %v870, %v389
    %v873 = vmul.f32 %v871, 0.01
    %v874 = vmul.f32 %v872, 0.01
    %v875 = vmax.f32 %v871, %v873
    %v876 = vmax.f32 %v872, %v874
    %v877 = vmul.f32 %v875, %v396
    %v878 = vmul.f32 %v876, %v396
    %v879 = vadd.f32 %v859, %v877
    %v880 = vadd.f32 %v860, %v878
    %v881 = vmul.f32 %v875, %v401
    %v882 = vmul.f32 %v876, %v401
    %v883 = vadd.f32 %v863, %v881
    %v884 = vadd.f32 %v864, %v882
    %v885 = vmul.f32 %v875, %v406
    %v886 = vmul.f32 %v876, %v406
    %v887 = vadd.f32 %v867, %v885
    %v888 = vadd.f32 %v868, %v886
    %v889 = vmul.f32 %v667, %v411
    %v890 = vmul.f32 %v668, %v411
    %v891 = vadd.f32 %v889, %v414
    %v892 = vadd.f32 %v890, %v414
    %v893 = vmul.f32 %v891, 0.01
    %v894 = vmul.f32 %v892, 0.01
    %v895 = vmax.f32 %v891, %v893
    %v896 = vmax.f32 %v892, %v894
    %v897 = vmul.f32 %v895, %v421
    %v898 = vmul.f32 %v896, %v421
    %v899 = vadd.f32 %v879, %v897
    %v900 = vadd.f32 %v880, %v898
    %v901 = vmul.f32 %v895, %v426
    %v902 = vmul.f32 %v896, %v426
    %v903 = vadd.f32 %v883, %v901
    %v904 = vadd.f32 %v884, %v902
    %v905 = vmul.f32 %v895, %v431
    %v906 = vmul.f32 %v896, %v431
    %v907 = vadd.f32 %v887, %v905
    %v908 = vadd.f32 %v888, %v906
    %v909 = vmul.f32 %v667, %v436
    %v910 = vmul.f32 %v668, %v436
    %v911 = vadd.f32 %v909, %v439
    %v912 = vadd.f32 %v910, %v439
    %v913 = vmul.f32 %v911, 0.01
    %v914 = vmul.f32 %v912, 0.01
    %v915 = vmax.f32 %v911, %v913
    %v916 = vmax.f32 %v912, %v914
    %v917 = vmul.f32 %v915, %v446
    %v918 = vmul.f32 %v916, %v446
    %v919 = vadd.f32 %v899, %v917
    %v920 = vadd.f32 %v900, %v918
    %v921 = vmul.f32 %v915, %v451
    %v922 = vmul.f32 %v916, %v451
    %v923 = vadd.f32 %v903, %v921
    %v924 = vadd.f32 %v904, %v922
    %v925 = vmul.f32 %v915, %v456
    %v926 = vmul.f32 %v916, %v456
    %v927 = vadd.f32 %v907, %v925
    %v928 = vadd.f32 %v908, %v926
    %v929 = vmul.f32 %v667, %v461
    %v930 = vmul.f32 %v668, %v461
    %v931 = vadd.f32 %v929, %v464
    %v932 = vadd.f32 %v930, %v464
    %v933 = vmul.f32 %v931, 0.01
    %v934 = vmul.f32 %v932, 0.01
    %v935 = vmax.f32 %v931, %v933
    %v936 = vmax.f32 %v932, %v934
    %v937 = vmul.f32 %v935, %v471
    %v938 = vmul.f32 %v936, %v471
    %v939 = vadd.f32 %v919, %v937
    %v940 = vadd.f32 %v920, %v938
    %v941 = vmul.f32 %v935, %v476
    %v942 = vmul.f32 %v936, %v476
    %v943 = vadd.f32 %v923, %v941
    %v944 = vadd.f32 %v924, %v942
    %v945 = vmul.f32 %v935, %v481
    %v946 = vmul.f32 %v936, %v481
    %v947 = vadd.f32 %v927, %v945
    %v948 = vadd.f32 %v928, %v946
    %v949 = vmul.f32 %v667, %v486
    %v950 = vmul.f32 %v668, %v486
    %v951 = vadd.f32 %v949, %v489
    %v952 = vadd.f32 %v950, %v489
    %v953 = vmul.f32 %v951, 0.01
    %v954 = vmul.f32 %v952, 0.01
    %v955 = vmax.f32 %v951, %v953
    %v956 = vmax.f32 %v952, %v954
    %v957 = vmul.f32 %v955, %v496
    %v958 = vmul.f32 %v956, %v496
    %v959 = vadd.f32 %v939, %v957
    %v960 = vadd.f32 %v940, %v958
    %v961 = vmul.f32 %v955, %v501
    %v962 = vmul.f32 %v956, %v501
    %v963 = vadd.f32 %v943, %v961
    %v964 = vadd.f32 %v944, %v962
    %v965 = vmul.f32 %v955, %v506
    %v966 = vmul.f32 %v956, %v506
    %v967 = vadd.f32 %v947, %v965
    %v968 = vadd.f32 %v948, %v966
    %v969 = vmul.f32 %v667, %v511
    %v970 = vmul.f32 %v668, %v511
    %v971 = vadd.f32 %v969, %v514
    %v972 = vadd.f32 %v970, %v514
    %v973 = vmul.f32 %v971, 0.01
    %v974 = vmul.f32 %v972, 0.01
    %v975 = vmax.f32 %v971, %v973
    %v976 = vmax.f32 %v972, %v974
    %v977 = vmul.f32 %v975, %v521
    %v978 = vmul.f32 %v976, %v521
    %v979 = vadd.f32 %v959, %v977
    %v980 = vadd.f32 %v960, %v978
    %v981 = vmul.f32 %v975, %v526
    %v982 = vmul.f32 %v976, %v526
    %v983 = vadd.f32 %v963, %v981
    %v984 = vadd.f32 %v964, %v982
    %v985 = vmul.f32 %v975, %v531
    %v986 = vmul.f32 %v976, %v531
    %v987 = vadd.f32 %v967, %v985
    %v988 = vadd.f32 %v968, %v986
    %v989 = vmul.f32 %v667, %v536
    %v990 = vmul.f32 %v668, %v536
    %v991 = vadd.f32 %v989, %v539
    %v992 = vadd.f32 %v990, %v539
    %v993 = vmul.f32 %v991, 0.01
    %v994 = vmul.f32 %v992, 0.01
    %v995 = vmax.f32 %v991, %v993
    %v996 = vmax.f32 %v992, %v994
    %v997 = vmul.f32 %v995, %v546
    %v998 = vmul.f32 %v996, %v546
    %v999 = vadd.f32 %v979, %v997
    %v1000 = vadd.f32 %v980, %v998
    %v1001 = vmul.f32 %v995, %v551
    %v1002 = vmul.f32 %v996, %v551
    %v1003 = vadd.f32 %v983, %v1001
    %v1004 = vadd.f32 %v984, %v1002
    %v1005 = vmul.f32 %v995, %v556
    %v1006 = vmul.f32 %v996, %v556
    %v1007 = vadd.f32 %v987, %v1005
    %v1008 = vadd.f32 %v988, %v1006
    %v1009 = vmul.f32 %v667, %v561
    %v1010 = vmul.f32 %v668, %v561
    %v1011 = vadd.f32 %v1009, %v564
    %v1012 = vadd.f32 %v1010, %v564
    %v1013 = vmul.f32 %v1011, 0.01
    %v1014 = vmul.f32 %v1012, 0.01
    %v1015 = vmax.f32 %v1011, %v1013
    %v1016 = vmax.f32 %v1012, %v1014
    %v1017 = vmul.f32 %v1015, %v571
    %v1018 = vmul.f32 %v1016, %v571
    %v1019 = vadd.f32 %v999, %v1017
    %v1020 = vadd.f32 %v1000, %v1018
    %v1021 = vmul.f32 %v1015, %v576
    %v1022 = vmul.f32 %v1016, %v576
    %v1023 = vadd.f32 %v1003, %v1021
    %v1024 = vadd.f32 %v1004, %v1022
    %v1025 = vmul.f32 %v1015, %v581
    %v1026 = vmul.f32 %v1016, %v581
    %v1027 = vadd.f32 %v1007, %v1025
    %v1028 = vadd.f32 %v1008, %v1026
    %v1029 = vmul.f32 %v667, %v586
    %v1030 = vmul.f32 %v668, %v586
    %v1031 = vadd.f32 %v1029, %v589
    %v1032 = vadd.f32 %v1030, %v589
    %v1033 = vmul.f32 %v1031, 0.01
    %v1034 = vmul.f32 %v1032, 0.01
    %v1035 = vmax.f32 %v1031, %v1033
    %v1036 = vmax.f32 %v1032, %v1034
    %v1037 = vmul.f32 %v1035, %v596
    %v1038 = vmul.f32 %v1036, %v596
    %v1039 = vadd.f32 %v1019, %v1037
    %v1040 = vadd.f32 %v1020, %v1038
    %v1041 = vmul.f32 %v1035, %v601
    %v1042 = vmul.f32 %v1036, %v601
    %v1043 = vadd.f32 %v1023, %v1041
    %v1044 = vadd.f32 %v1024, %v1042
    %v1045 = vmul.f32 %v1035, %v606
    %v1046 = vmul.f32 %v1036, %v606
    %v1047 = vadd.f32 %v1027, %v1045
    %v1048 = vadd.f32 %v1028, %v1046
    %v1049 = vmul.f32 %v667, %v611
    %v1050 = vmul.f32 %v668, %v611
    %v1051 = vadd.f32 %v1049, %v614
    %v1052 = vadd.f32 %v1050, %v614
    %v1053 = vmul.f32 %v1051, 0.01
    %v1054 = vmul.f32 %v1052, 0.01
    %v1055 = vmax.f32 %v1051, %v1053
    %v1056 = vmax.f32 %v1052, %v1054
    %v1057 = vmul.f32 %v1055, %v621
    %v1058 = vmul.f32 %v1056, %v621
    %v1059 = vadd.f32 %v1039, %v1057
    %v1060 = vadd.f32 %v1040, %v1058
    %v1061 = vmul.f32 %v1055, %v626
    %v1062 = vmul.f32 %v1056, %v626
    %v1063 = vadd.f32 %v1043, %v1061
    %v1064 = vadd.f32 %v1044, %v1062
    %v1065 = vmul.f32 %v1055, %v631
    %v1066 = vmul.f32 %v1056, %v631
    %v1067 = vadd.f32 %v1047, %v1065
    %v1068 = vadd.f32 %v1048, %v1066
    %v1069 = vmul.f32 %v1059, 0.01
    %v1070 = vmul.f32 %v1060, 0.01
    %v1071 = vmax.f32 %v1059, %v1069
    %v1072 = vmax.f32 %v1060, %v1070
    %v1073 = vmul.f32 %v1071, %v640
    %v1074 = vmul.f32 %v1072, %v640
    %v1075 = vadd.f32 %v1073, %v643
    %v1076 = vadd.f32 %v1074, %v643
    %v1077 = vmul.f32 %v1063, 0.01
    %v1078 = vmul.f32 %v1064, 0.01
    %v1079 = vmax.f32 %v1063, %v1077
    %v1080 = vmax.f32 %v1064, %v1078
    %v1081 = vmul.f32 %v1079, %v650
    %v1082 = vmul.f32 %v1080, %v650
    %v1083 = vadd.f32 %v1075, %v1081
    %v1084 = vadd.f32 %v1076, %v1082
    %v1085 = vmul.f32 %v1067, 0.01
    %v1086 = vmul.f32 %v1068, 0.01
    %v1087 = vmax.f32 %v1067, %v1085
    %v1088 = vmax.f32 %v1068, %v1086
    %v1089 = vmul.f32 %v1087, %v659
    %v1090 = vmul.f32 %v1088, %v659
    %v1091 = vadd.f32 %v1083, %v1089
    %v1092 = vadd.f32 %v1084, %v1090
    %s1093 = scalar_lea.vmem %s2, 16
    %1094 = vst [vmem:[%s1093] sm:$0xff] %v1091
    %1095 = vst [vmem:[%s1093 + $0x8] sm:$0xff] %v1092
    // Predicated region
    $region14: #{network_model_forward.1} parent=1 // pred_check
      _
    $region15: #{network_model_forward.1} parent=1 // pred_check_branch
      %1097 = sbr.rel (0) target = $region17
    $region16: #{network_model_forward.1} parent=1 // pred_region
      _
    $region17: #{network_model_forward.1} parent=1 // pred_fallthru
      _
    // Predicated region
    $region18: #{network_model_forward.1} parent=1 // pred_check
      _
    $region19: #{network_model_forward.1} parent=1 // pred_check_branch
      %1099 = sbr.rel (0) target = $region21
    $region20: #{network_model_forward.1} parent=1 // pred_region
      _
    $region21: #{network_model_forward.1} parent=1 // pred_fallthru
      _
    %1100 = vsyncpa [#allocation3], 1

</llo_original>
